<compile_context>
chip_gen: v5e
topology: v5e:2x2
jax: 0.10.0
libtpu: 0.0.40
codegen_flags: <defaults>
</compile_context>

<pallas_src>
import jax
import jax.numpy as jnp
from jax import lax
from jax.experimental import pallas as pl
from jax.experimental.pallas import tpu as pltpu


def _sigmoid_tanh(x):
    # sigmoid(x) == 0.5 * (tanh(x/2) + 1): single EUP op (no exp + divide).
    return 0.5 * (jnp.tanh(0.5 * x) + 1.0)


def fusion_lstm_kernel(x_ref, w_ref, bl_ref, w1_ref, b1_ref, w2_ref, b2_ref,
                       o_ref):
    # Batch-in-lanes layout:
    #   x_ref : (seq_len, inp, TB)   full time slab for this batch tile
    #   w_ref : (4H, inp+hid)        stacked [W_ih | W_hh]  (i|f|g|o gate order)
    #   bl_ref: (4H, 1)              b_ih + b_hh
    #   w1_ref: (out, hid), b1_ref: (out, 1)
    #   w2_ref: (C, out),   b2_ref: (C, 1)
    #   o_ref : (C, TB)              log-softmax over the class (sublane) axis
    seq_len, inp, tb = x_ref.shape
    hid = bl_ref.shape[0] // 4

    # Hoisted weight load and bias broadcast (loop is unrolled; JAX does not
    # CSE broadcast_in_dim, so do it once here).
    w_all = w_ref[...]                                    # (4H, inp+hid)
    bias = jnp.broadcast_to(bl_ref[...], (4 * hid, tb))   # (4H, TB)

    def step(t, carry):
        h, c = carry
        x_t = x_ref[t]                                    # (inp, TB), lane-dense
        op = jnp.concatenate([x_t, h], axis=0)            # (inp+hid, TB)
        gates = jnp.dot(w_all, op,
                        preferred_element_type=jnp.float32) + bias   # (4H, TB)
        # Sublane slices at multiples of 8 — free.
        i_g = _sigmoid_tanh(gates[0 * hid:1 * hid, :])
        f_g = _sigmoid_tanh(gates[1 * hid:2 * hid, :])
        g_g = jnp.tanh(gates[2 * hid:3 * hid, :])
        o_g = _sigmoid_tanh(gates[3 * hid:4 * hid, :])
        c_new = f_g * c + i_g * g_g
        h_new = o_g * jnp.tanh(c_new)
        return h_new, c_new

    h0 = jnp.zeros((hid, tb), jnp.float32)
    c0 = jnp.zeros((hid, tb), jnp.float32)
    h, _ = lax.fori_loop(0, seq_len, step, (h0, c0), unroll=True)

    # TODO(synk): nn.Dropout(p) is identity here (eval-mode forward); a
    # training-mode mask would use pltpu.prng_seed / pltpu.prng_random_bits.
    z1 = jnp.dot(w1_ref[...], h, preferred_element_type=jnp.float32) + b1_ref[...]
    z1 = jnp.maximum(z1, 0.0)                              # act = nn.ReLU
    z2 = jnp.dot(w2_ref[...], z1, preferred_element_type=jnp.float32) + b2_ref[...]
    # LogSoftmax over classes (axis 0 here == dim=1 of the (B, C) result).
    m = jnp.max(z2, axis=0, keepdims=True)
    lse = m + jnp.log(jnp.sum(jnp.exp(z2 - m), axis=0, keepdims=True))
    o_ref[...] = z2 - lse


def fusion_model_lstm_forward(x, params, *, seq_len, batch_tile=128):
    """x: (current_batch * seq_len, inp). Returns (log_probs (B, C), current_batch)."""
    wih, whh, b_lstm, w1, b1, w2, b2 = params
    total, inp = x.shape
    assert total % seq_len == 0, "rows must be divisible by seq_len"
    current_batch = total // seq_len
    hid = whh.shape[0]
    out_dim = w1.shape[1]
    num_cls = w2.shape[1]

    # One-time weight repacking into the batch-in-lanes layout.
    w_stack = jnp.concatenate([wih, whh], axis=0).T        # (4H, inp+hid)
    bl_col = b_lstm.reshape(4 * hid, 1)
    w1_t = w1.T                                            # (out, hid)
    b1_col = b1.reshape(out_dim, 1)
    w2_t = w2.T                                            # (C, out)
    b2_col = b2.reshape(num_cls, 1)

    # x -> (seq_len, inp, B_pad): batch tile lives in the 128-wide lane axis.
    # TODO(synk): produce x upstream in this layout to avoid the extra HBM pass.
    x3 = x.reshape(current_batch, seq_len, inp)
    x_lanes = jnp.transpose(x3, (1, 2, 0))                 # (S, inp, B)

    TB = max(128, (batch_tile // 128) * 128)               # keep lane-dense tiles
    B_pad = ((current_batch + TB - 1) // TB) * TB
    if B_pad != current_batch:
        x_lanes = jnp.pad(x_lanes, ((0, 0), (0, 0), (0, B_pad - current_batch)))
    nb = B_pad // TB
    const2 = lambda b: (0, 0)

    bytes_w = 4 * ((inp + hid) * 4 * hid + 4 * hid
                   + hid * out_dim + out_dim + out_dim * num_cls + num_cls)
    cost = pl.CostEstimate(
        flops=2 * B_pad * seq_len * (inp + hid) * 4 * hid
              + 2 * B_pad * (hid * out_dim + out_dim * num_cls),
        transcendentals=B_pad * seq_len * 5 * hid + B_pad * (num_cls + 1),
        bytes_accessed=4 * B_pad * seq_len * inp + 4 * B_pad * num_cls + bytes_w,
    )

    y_cn = pl.pallas_call(
        fusion_lstm_kernel,
        out_shape=jax.ShapeDtypeStruct((num_cls, B_pad), jnp.float32),
        grid_spec=pltpu.PrefetchScalarGridSpec(
            num_scalar_prefetch=0,
            grid=(nb,),
            in_specs=[
                pl.BlockSpec((seq_len, inp, TB), lambda b: (0, 0, b)),  # x slab
                pl.BlockSpec((4 * hid, inp + hid), const2),             # [W_ih|W_hh]
                pl.BlockSpec((4 * hid, 1), const2),                     # b_ih + b_hh
                pl.BlockSpec((out_dim, hid), const2),                   # fc1 W
                pl.BlockSpec((out_dim, 1), const2),                     # fc1 b
                pl.BlockSpec((num_cls, out_dim), const2),               # fc2 W
                pl.BlockSpec((num_cls, 1), const2),                     # fc2 b
            ],
            out_specs=pl.BlockSpec((num_cls, TB), lambda b: (0, b)),
        ),
        compiler_params=pltpu.CompilerParams(
            dimension_semantics=("parallel",),
        ),
        cost_estimate=cost,
    )(x_lanes, w_stack, bl_col, w1_t, b1_col, w2_t, b2_col)

    # (C, B_pad) -> (B, C): tiny wrapper-side transpose of the final logits.
    y = y_cn[:, :current_batch].T
    return y, current_batch


def init_params(key, inp, hid, out_dim, num_cls):
    """Deterministic init matching torch shapes; weights stored (in, out)
    relative to torch's (out, in). LSTM gate order: i, f, g, o."""
    ks = jax.random.split(key, 8)
    s_l = 1.0 / (hid ** 0.5)
    s_1 = 1.0 / (hid ** 0.5)
    s_2 = 1.0 / (out_dim ** 0.5)
    u = lambda k, shape, s: jax.random.uniform(k, shape, jnp.float32, -s, s)
    wih = u(ks[0], (inp, 4 * hid), s_l)
    whh = u(ks[1], (hid, 4 * hid), s_l)
    b_lstm = u(ks[2], (1, 4 * hid), s_l) + u(ks[3], (1, 4 * hid), s_l)  # b_ih + b_hh
    w1 = u(ks[4], (hid, out_dim), s_1)
    b1 = u(ks[5], (1, out_dim), s_1)
    w2 = u(ks[6], (out_dim, num_cls), s_2)
    b2 = u(ks[7], (1, num_cls), s_2)
    return wih, whh, b_lstm, w1, b1, w2, b2


def reference_forward(x, params, seq_len):
    """Plain-JAX reference of the same math (eval-mode dropout)."""
    wih, whh, b_lstm, w1, b1, w2, b2 = params
    inp = x.shape[-1]
    hid = whh.shape[0]
    B = x.shape[0] // seq_len
    xs = x.reshape(B, seq_len, inp).astype(jnp.float32)
    h = jnp.zeros((B, hid), jnp.float32)
    c = jnp.zeros((B, hid), jnp.float32)
    for t in range(seq_len):
        gates = xs[:, t, :] @ wih + h @ whh + b_lstm
        i = jax.nn.sigmoid(gates[:, 0 * hid:1 * hid])
        f = jax.nn.sigmoid(gates[:, 1 * hid:2 * hid])
        g = jnp.tanh(gates[:, 2 * hid:3 * hid])
        o = jax.nn.sigmoid(gates[:, 3 * hid:4 * hid])
        c = f * c + i * g
        h = o * jnp.tanh(c)
    z1 = jnp.maximum(h @ w1 + b1, 0.0)
    z2 = z1 @ w2 + b2
    m = jnp.max(z2, axis=1, keepdims=True)
    return z2 - (m + jnp.log(jnp.sum(jnp.exp(z2 - m), axis=1, keepdims=True)))


if __name__ == "__main__":
    key = jax.random.PRNGKey(0)
    kx, kp = jax.random.split(key)

    # Small shapes consistent with the module: inp=16 features, seq_len=8,
    # current_batch=8, hid=32, fc1 out=32, num_cls=8.
    seq_len, current_batch = 8, 8
    inp, hid, out_dim, num_cls = 16, 32, 32, 8

    x = jax.random.normal(kx, (current_batch * seq_len, inp), jnp.float32)
    params = init_params(kp, inp, hid, out_dim, num_cls)

    y, cb = fusion_model_lstm_forward(x, params, seq_len=seq_len)
    y = jax.block_until_ready(y)

    ref = reference_forward(x, params, seq_len)
    assert y.shape == (current_batch, num_cls)
    assert cb == current_batch
    err = float(jnp.max(jnp.abs(y - ref)))
    assert err < 1e-4, err

    print("KERNEL_OK")
</pallas_src>

<mosaic_0001>
module attributes {stable_mosaic.version = 11 : i64} {
  func.func @fusion_lstm_kernel(%arg0: i32, %arg1: memref<8x16x128xf32, #tpu.memory_space<vmem>>, %arg2: memref<128x48xf32, #tpu.memory_space<vmem>>, %arg3: memref<128x1xf32, #tpu.memory_space<vmem>>, %arg4: memref<32x32xf32, #tpu.memory_space<vmem>>, %arg5: memref<32x1xf32, #tpu.memory_space<vmem>>, %arg6: memref<8x32xf32, #tpu.memory_space<vmem>>, %arg7: memref<8x1xf32, #tpu.memory_space<vmem>>, %arg8: memref<8x128xf32, #tpu.memory_space<vmem>>) attributes {dimension_semantics = [#tpu.dimension_semantics<parallel>], iteration_bounds = array<i64: 1>, scalar_prefetch = 0 : i64, scratch_operands = 0 : i64, tpu.core_type = #tpu.core_type<tc>, window_params = [{transform_indices = @transform_0, window_bounds = array<i64: 8, 16, 128>}, {pipeline_mode = #tpu.pipeline_mode<synchronous>, transform_indices = @transform_1, window_bounds = array<i64: 128, 48>}, {pipeline_mode = #tpu.pipeline_mode<synchronous>, transform_indices = @transform_2, window_bounds = array<i64: 128, 1>}, {pipeline_mode = #tpu.pipeline_mode<synchronous>, transform_indices = @transform_3, window_bounds = array<i64: 32, 32>}, {pipeline_mode = #tpu.pipeline_mode<synchronous>, transform_indices = @transform_4, window_bounds = array<i64: 32, 1>}, {pipeline_mode = #tpu.pipeline_mode<synchronous>, transform_indices = @transform_5, window_bounds = array<i64: 8, 32>}, {pipeline_mode = #tpu.pipeline_mode<synchronous>, transform_indices = @transform_6, window_bounds = array<i64: 8, 1>}, {transform_indices = @transform_7, window_bounds = array<i64: 8, 128>}]} {
    %c0 = arith.constant 0 : index
    %c0_0 = arith.constant 0 : index
    %0 = vector.load %arg2[%c0, %c0_0] : memref<128x48xf32, #tpu.memory_space<vmem>>, vector<128x48xf32>
    %c0_1 = arith.constant 0 : index
    %c0_2 = arith.constant 0 : index
    %1 = vector.load %arg3[%c0_1, %c0_2] : memref<128x1xf32, #tpu.memory_space<vmem>>, vector<128x1xf32>
    %2 = vector.shape_cast %1 : vector<128x1xf32> to vector<128x1xf32>
    %3 = vector.broadcast %2 : vector<128x1xf32> to vector<128x128xf32>
    %cst = arith.constant 0.000000e+00 : f32
    %4 = vector.broadcast %cst : f32 to vector<32x128xf32>
    %cst_3 = arith.constant 0.000000e+00 : f32
    %5 = vector.broadcast %cst_3 : f32 to vector<32x128xf32>
    %c0_i32 = arith.constant 0 : i32
    %6 = arith.index_cast %c0_i32 : i32 to index
    %c0_4 = arith.constant 0 : index
    %c0_5 = arith.constant 0 : index
    %7 = vector.load %arg1[%6, %c0_4, %c0_5] : memref<8x16x128xf32, #tpu.memory_space<vmem>>, vector<1x16x128xf32>
    %8 = vector.shape_cast %7 : vector<1x16x128xf32> to vector<16x128xf32>
    %9 = tpu.concatenate %8, %4 in 0 : vector<16x128xf32>, vector<32x128xf32> -> vector<48x128xf32>
    %cst_6 = arith.constant dense<0.000000e+00> : vector<128x128xf32>
    %10 = tpu.matmul %0, %9, %cst_6 {dimension_numbers = #tpu.dot_dimension_numbers<[1], [0], [0], [1], [0, 0, 1, 1], [], []>} : vector<128x48xf32>, vector<48x128xf32>, vector<128x128xf32> -> vector<128x128xf32>
    %11 = arith.addf %10, %3 : vector<128x128xf32>
    %12 = vector.extract_strided_slice %11 {offsets = [0, 0], sizes = [32, 128], strides = [1, 1]} : vector<128x128xf32> to vector<32x128xf32>
    %cst_7 = arith.constant 5.000000e-01 : f32
    %13 = vector.broadcast %cst_7 : f32 to vector<32x128xf32>
    %14 = arith.mulf %13, %12 : vector<32x128xf32>
    %15 = math.tanh %14 : vector<32x128xf32>
    %cst_8 = arith.constant 1.000000e+00 : f32
    %16 = vector.broadcast %cst_8 : f32 to vector<32x128xf32>
    %17 = arith.addf %15, %16 : vector<32x128xf32>
    %cst_9 = arith.constant 5.000000e-01 : f32
    %18 = vector.broadcast %cst_9 : f32 to vector<32x128xf32>
    %19 = arith.mulf %18, %17 : vector<32x128xf32>
    %20 = vector.extract_strided_slice %11 {offsets = [32, 0], sizes = [32, 128], strides = [1, 1]} : vector<128x128xf32> to vector<32x128xf32>
    %cst_10 = arith.constant 5.000000e-01 : f32
    %21 = vector.broadcast %cst_10 : f32 to vector<32x128xf32>
    %22 = arith.mulf %21, %20 : vector<32x128xf32>
    %23 = math.tanh %22 : vector<32x128xf32>
    %cst_11 = arith.constant 1.000000e+00 : f32
    %24 = vector.broadcast %cst_11 : f32 to vector<32x128xf32>
    %25 = arith.addf %23, %24 : vector<32x128xf32>
    %cst_12 = arith.constant 5.000000e-01 : f32
    %26 = vector.broadcast %cst_12 : f32 to vector<32x128xf32>
    %27 = arith.mulf %26, %25 : vector<32x128xf32>
    %28 = vector.extract_strided_slice %11 {offsets = [64, 0], sizes = [32, 128], strides = [1, 1]} : vector<128x128xf32> to vector<32x128xf32>
    %29 = math.tanh %28 : vector<32x128xf32>
    %30 = vector.extract_strided_slice %11 {offsets = [96, 0], sizes = [32, 128], strides = [1, 1]} : vector<128x128xf32> to vector<32x128xf32>
    %cst_13 = arith.constant 5.000000e-01 : f32
    %31 = vector.broadcast %cst_13 : f32 to vector<32x128xf32>
    %32 = arith.mulf %31, %30 : vector<32x128xf32>
    %33 = math.tanh %32 : vector<32x128xf32>
    %cst_14 = arith.constant 1.000000e+00 : f32
    %34 = vector.broadcast %cst_14 : f32 to vector<32x128xf32>
    %35 = arith.addf %33, %34 : vector<32x128xf32>
    %cst_15 = arith.constant 5.000000e-01 : f32
    %36 = vector.broadcast %cst_15 : f32 to vector<32x128xf32>
    %37 = arith.mulf %36, %35 : vector<32x128xf32>
    %38 = arith.mulf %27, %5 : vector<32x128xf32>
    %39 = arith.mulf %19, %29 : vector<32x128xf32>
    %40 = arith.addf %38, %39 : vector<32x128xf32>
    %41 = math.tanh %40 : vector<32x128xf32>
    %42 = arith.mulf %37, %41 : vector<32x128xf32>
    %c1_i32 = arith.constant 1 : i32
    %43 = arith.index_cast %c1_i32 : i32 to index
    %c0_16 = arith.constant 0 : index
    %c0_17 = arith.constant 0 : index
    %44 = vector.load %arg1[%43, %c0_16, %c0_17] : memref<8x16x128xf32, #tpu.memory_space<vmem>>, vector<1x16x128xf32>
    %45 = vector.shape_cast %44 : vector<1x16x128xf32> to vector<16x128xf32>
    %46 = tpu.concatenate %45, %42 in 0 : vector<16x128xf32>, vector<32x128xf32> -> vector<48x128xf32>
    %cst_18 = arith.constant dense<0.000000e+00> : vector<128x128xf32>
    %47 = tpu.matmul %0, %46, %cst_18 {dimension_numbers = #tpu.dot_dimension_numbers<[1], [0], [0], [1], [0, 0, 1, 1], [], []>} : vector<128x48xf32>, vector<48x128xf32>, vector<128x128xf32> -> vector<128x128xf32>
    %48 = arith.addf %47, %3 : vector<128x128xf32>
    %49 = vector.extract_strided_slice %48 {offsets = [0, 0], sizes = [32, 128], strides = [1, 1]} : vector<128x128xf32> to vector<32x128xf32>
    %cst_19 = arith.constant 5.000000e-01 : f32
    %50 = vector.broadcast %cst_19 : f32 to vector<32x128xf32>
    %51 = arith.mulf %50, %49 : vector<32x128xf32>
    %52 = math.tanh %51 : vector<32x128xf32>
    %cst_20 = arith.constant 1.000000e+00 : f32
    %53 = vector.broadcast %cst_20 : f32 to vector<32x128xf32>
    %54 = arith.addf %52, %53 : vector<32x128xf32>
    %cst_21 = arith.constant 5.000000e-01 : f32
    %55 = vector.broadcast %cst_21 : f32 to vector<32x128xf32>
    %56 = arith.mulf %55, %54 : vector<32x128xf32>
    %57 = vector.extract_strided_slice %48 {offsets = [32, 0], sizes = [32, 128], strides = [1, 1]} : vector<128x128xf32> to vector<32x128xf32>
    %cst_22 = arith.constant 5.000000e-01 : f32
    %58 = vector.broadcast %cst_22 : f32 to vector<32x128xf32>
    %59 = arith.mulf %58, %57 : vector<32x128xf32>
    %60 = math.tanh %59 : vector<32x128xf32>
    %cst_23 = arith.constant 1.000000e+00 : f32
    %61 = vector.broadcast %cst_23 : f32 to vector<32x128xf32>
    %62 = arith.addf %60, %61 : vector<32x128xf32>
    %cst_24 = arith.constant 5.000000e-01 : f32
    %63 = vector.broadcast %cst_24 : f32 to vector<32x128xf32>
    %64 = arith.mulf %63, %62 : vector<32x128xf32>
    %65 = vector.extract_strided_slice %48 {offsets = [64, 0], sizes = [32, 128], strides = [1, 1]} : vector<128x128xf32> to vector<32x128xf32>
    %66 = math.tanh %65 : vector<32x128xf32>
    %67 = vector.extract_strided_slice %48 {offsets = [96, 0], sizes = [32, 128], strides = [1, 1]} : vector<128x128xf32> to vector<32x128xf32>
    %cst_25 = arith.constant 5.000000e-01 : f32
    %68 = vector.broadcast %cst_25 : f32 to vector<32x128xf32>
    %69 = arith.mulf %68, %67 : vector<32x128xf32>
    %70 = math.tanh %69 : vector<32x128xf32>
    %cst_26 = arith.constant 1.000000e+00 : f32
    %71 = vector.broadcast %cst_26 : f32 to vector<32x128xf32>
    %72 = arith.addf %70, %71 : vector<32x128xf32>
    %cst_27 = arith.constant 5.000000e-01 : f32
    %73 = vector.broadcast %cst_27 : f32 to vector<32x128xf32>
    %74 = arith.mulf %73, %72 : vector<32x128xf32>
    %75 = arith.mulf %64, %40 : vector<32x128xf32>
    %76 = arith.mulf %56, %66 : vector<32x128xf32>
    %77 = arith.addf %75, %76 : vector<32x128xf32>
    %78 = math.tanh %77 : vector<32x128xf32>
    %79 = arith.mulf %74, %78 : vector<32x128xf32>
    %c2_i32 = arith.constant 2 : i32
    %80 = arith.index_cast %c2_i32 : i32 to index
    %c0_28 = arith.constant 0 : index
    %c0_29 = arith.constant 0 : index
    %81 = vector.load %arg1[%80, %c0_28, %c0_29] : memref<8x16x128xf32, #tpu.memory_space<vmem>>, vector<1x16x128xf32>
    %82 = vector.shape_cast %81 : vector<1x16x128xf32> to vector<16x128xf32>
    %83 = tpu.concatenate %82, %79 in 0 : vector<16x128xf32>, vector<32x128xf32> -> vector<48x128xf32>
    %cst_30 = arith.constant dense<0.000000e+00> : vector<128x128xf32>
    %84 = tpu.matmul %0, %83, %cst_30 {dimension_numbers = #tpu.dot_dimension_numbers<[1], [0], [0], [1], [0, 0, 1, 1], [], []>} : vector<128x48xf32>, vector<48x128xf32>, vector<128x128xf32> -> vector<128x128xf32>
    %85 = arith.addf %84, %3 : vector<128x128xf32>
    %86 = vector.extract_strided_slice %85 {offsets = [0, 0], sizes = [32, 128], strides = [1, 1]} : vector<128x128xf32> to vector<32x128xf32>
    %cst_31 = arith.constant 5.000000e-01 : f32
    %87 = vector.broadcast %cst_31 : f32 to vector<32x128xf32>
    %88 = arith.mulf %87, %86 : vector<32x128xf32>
    %89 = math.tanh %88 : vector<32x128xf32>
    %cst_32 = arith.constant 1.000000e+00 : f32
    %90 = vector.broadcast %cst_32 : f32 to vector<32x128xf32>
    %91 = arith.addf %89, %90 : vector<32x128xf32>
    %cst_33 = arith.constant 5.000000e-01 : f32
    %92 = vector.broadcast %cst_33 : f32 to vector<32x128xf32>
    %93 = arith.mulf %92, %91 : vector<32x128xf32>
    %94 = vector.extract_strided_slice %85 {offsets = [32, 0], sizes = [32, 128], strides = [1, 1]} : vector<128x128xf32> to vector<32x128xf32>
    %cst_34 = arith.constant 5.000000e-01 : f32
    %95 = vector.broadcast %cst_34 : f32 to vector<32x128xf32>
    %96 = arith.mulf %95, %94 : vector<32x128xf32>
    %97 = math.tanh %96 : vector<32x128xf32>
    %cst_35 = arith.constant 1.000000e+00 : f32
    %98 = vector.broadcast %cst_35 : f32 to vector<32x128xf32>
    %99 = arith.addf %97, %98 : vector<32x128xf32>
    %cst_36 = arith.constant 5.000000e-01 : f32
    %100 = vector.broadcast %cst_36 : f32 to vector<32x128xf32>
    %101 = arith.mulf %100, %99 : vector<32x128xf32>
    %102 = vector.extract_strided_slice %85 {offsets = [64, 0], sizes = [32, 128], strides = [1, 1]} : vector<128x128xf32> to vector<32x128xf32>
    %103 = math.tanh %102 : vector<32x128xf32>
    %104 = vector.extract_strided_slice %85 {offsets = [96, 0], sizes = [32, 128], strides = [1, 1]} : vector<128x128xf32> to vector<32x128xf32>
    %cst_37 = arith.constant 5.000000e-01 : f32
    %105 = vector.broadcast %cst_37 : f32 to vector<32x128xf32>
    %106 = arith.mulf %105, %104 : vector<32x128xf32>
    %107 = math.tanh %106 : vector<32x128xf32>
    %cst_38 = arith.constant 1.000000e+00 : f32
    %108 = vector.broadcast %cst_38 : f32 to vector<32x128xf32>
    %109 = arith.addf %107, %108 : vector<32x128xf32>
    %cst_39 = arith.constant 5.000000e-01 : f32
    %110 = vector.broadcast %cst_39 : f32 to vector<32x128xf32>
    %111 = arith.mulf %110, %109 : vector<32x128xf32>
    %112 = arith.mulf %101, %77 : vector<32x128xf32>
    %113 = arith.mulf %93, %103 : vector<32x128xf32>
    %114 = arith.addf %112, %113 : vector<32x128xf32>
    %115 = math.tanh %114 : vector<32x128xf32>
    %116 = arith.mulf %111, %115 : vector<32x128xf32>
    %c3_i32 = arith.constant 3 : i32
    %117 = arith.index_cast %c3_i32 : i32 to index
    %c0_40 = arith.constant 0 : index
    %c0_41 = arith.constant 0 : index
    %118 = vector.load %arg1[%117, %c0_40, %c0_41] : memref<8x16x128xf32, #tpu.memory_space<vmem>>, vector<1x16x128xf32>
    %119 = vector.shape_cast %118 : vector<1x16x128xf32> to vector<16x128xf32>
    %120 = tpu.concatenate %119, %116 in 0 : vector<16x128xf32>, vector<32x128xf32> -> vector<48x128xf32>
    %cst_42 = arith.constant dense<0.000000e+00> : vector<128x128xf32>
    %121 = tpu.matmul %0, %120, %cst_42 {dimension_numbers = #tpu.dot_dimension_numbers<[1], [0], [0], [1], [0, 0, 1, 1], [], []>} : vector<128x48xf32>, vector<48x128xf32>, vector<128x128xf32> -> vector<128x128xf32>
    %122 = arith.addf %121, %3 : vector<128x128xf32>
    %123 = vector.extract_strided_slice %122 {offsets = [0, 0], sizes = [32, 128], strides = [1, 1]} : vector<128x128xf32> to vector<32x128xf32>
    %cst_43 = arith.constant 5.000000e-01 : f32
    %124 = vector.broadcast %cst_43 : f32 to vector<32x128xf32>
    %125 = arith.mulf %124, %123 : vector<32x128xf32>
    %126 = math.tanh %125 : vector<32x128xf32>
    %cst_44 = arith.constant 1.000000e+00 : f32
    %127 = vector.broadcast %cst_44 : f32 to vector<32x128xf32>
    %128 = arith.addf %126, %127 : vector<32x128xf32>
    %cst_45 = arith.constant 5.000000e-01 : f32
    %129 = vector.broadcast %cst_45 : f32 to vector<32x128xf32>
    %130 = arith.mulf %129, %128 : vector<32x128xf32>
    %131 = vector.extract_strided_slice %122 {offsets = [32, 0], sizes = [32, 128], strides = [1, 1]} : vector<128x128xf32> to vector<32x128xf32>
    %cst_46 = arith.constant 5.000000e-01 : f32
    %132 = vector.broadcast %cst_46 : f32 to vector<32x128xf32>
    %133 = arith.mulf %132, %131 : vector<32x128xf32>
    %134 = math.tanh %133 : vector<32x128xf32>
    %cst_47 = arith.constant 1.000000e+00 : f32
    %135 = vector.broadcast %cst_47 : f32 to vector<32x128xf32>
    %136 = arith.addf %134, %135 : vector<32x128xf32>
    %cst_48 = arith.constant 5.000000e-01 : f32
    %137 = vector.broadcast %cst_48 : f32 to vector<32x128xf32>
    %138 = arith.mulf %137, %136 : vector<32x128xf32>
    %139 = vector.extract_strided_slice %122 {offsets = [64, 0], sizes = [32, 128], strides = [1, 1]} : vector<128x128xf32> to vector<32x128xf32>
    %140 = math.tanh %139 : vector<32x128xf32>
    %141 = vector.extract_strided_slice %122 {offsets = [96, 0], sizes = [32, 128], strides = [1, 1]} : vector<128x128xf32> to vector<32x128xf32>
    %cst_49 = arith.constant 5.000000e-01 : f32
    %142 = vector.broadcast %cst_49 : f32 to vector<32x128xf32>
    %143 = arith.mulf %142, %141 : vector<32x128xf32>
    %144 = math.tanh %143 : vector<32x128xf32>
    %cst_50 = arith.constant 1.000000e+00 : f32
    %145 = vector.broadcast %cst_50 : f32 to vector<32x128xf32>
    %146 = arith.addf %144, %145 : vector<32x128xf32>
    %cst_51 = arith.constant 5.000000e-01 : f32
    %147 = vector.broadcast %cst_51 : f32 to vector<32x128xf32>
    %148 = arith.mulf %147, %146 : vector<32x128xf32>
    %149 = arith.mulf %138, %114 : vector<32x128xf32>
    %150 = arith.mulf %130, %140 : vector<32x128xf32>
    %151 = arith.addf %149, %150 : vector<32x128xf32>
    %152 = math.tanh %151 : vector<32x128xf32>
    %153 = arith.mulf %148, %152 : vector<32x128xf32>
    %c4_i32 = arith.constant 4 : i32
    %154 = arith.index_cast %c4_i32 : i32 to index
    %c0_52 = arith.constant 0 : index
    %c0_53 = arith.constant 0 : index
    %155 = vector.load %arg1[%154, %c0_52, %c0_53] : memref<8x16x128xf32, #tpu.memory_space<vmem>>, vector<1x16x128xf32>
    %156 = vector.shape_cast %155 : vector<1x16x128xf32> to vector<16x128xf32>
    %157 = tpu.concatenate %156, %153 in 0 : vector<16x128xf32>, vector<32x128xf32> -> vector<48x128xf32>
    %cst_54 = arith.constant dense<0.000000e+00> : vector<128x128xf32>
    %158 = tpu.matmul %0, %157, %cst_54 {dimension_numbers = #tpu.dot_dimension_numbers<[1], [0], [0], [1], [0, 0, 1, 1], [], []>} : vector<128x48xf32>, vector<48x128xf32>, vector<128x128xf32> -> vector<128x128xf32>
    %159 = arith.addf %158, %3 : vector<128x128xf32>
    %160 = vector.extract_strided_slice %159 {offsets = [0, 0], sizes = [32, 128], strides = [1, 1]} : vector<128x128xf32> to vector<32x128xf32>
    %cst_55 = arith.constant 5.000000e-01 : f32
    %161 = vector.broadcast %cst_55 : f32 to vector<32x128xf32>
    %162 = arith.mulf %161, %160 : vector<32x128xf32>
    %163 = math.tanh %162 : vector<32x128xf32>
    %cst_56 = arith.constant 1.000000e+00 : f32
    %164 = vector.broadcast %cst_56 : f32 to vector<32x128xf32>
    %165 = arith.addf %163, %164 : vector<32x128xf32>
    %cst_57 = arith.constant 5.000000e-01 : f32
    %166 = vector.broadcast %cst_57 : f32 to vector<32x128xf32>
    %167 = arith.mulf %166, %165 : vector<32x128xf32>
    %168 = vector.extract_strided_slice %159 {offsets = [32, 0], sizes = [32, 128], strides = [1, 1]} : vector<128x128xf32> to vector<32x128xf32>
    %cst_58 = arith.constant 5.000000e-01 : f32
    %169 = vector.broadcast %cst_58 : f32 to vector<32x128xf32>
    %170 = arith.mulf %169, %168 : vector<32x128xf32>
    %171 = math.tanh %170 : vector<32x128xf32>
    %cst_59 = arith.constant 1.000000e+00 : f32
    %172 = vector.broadcast %cst_59 : f32 to vector<32x128xf32>
    %173 = arith.addf %171, %172 : vector<32x128xf32>
    %cst_60 = arith.constant 5.000000e-01 : f32
    %174 = vector.broadcast %cst_60 : f32 to vector<32x128xf32>
    %175 = arith.mulf %174, %173 : vector<32x128xf32>
    %176 = vector.extract_strided_slice %159 {offsets = [64, 0], sizes = [32, 128], strides = [1, 1]} : vector<128x128xf32> to vector<32x128xf32>
    %177 = math.tanh %176 : vector<32x128xf32>
    %178 = vector.extract_strided_slice %159 {offsets = [96, 0], sizes = [32, 128], strides = [1, 1]} : vector<128x128xf32> to vector<32x128xf32>
    %cst_61 = arith.constant 5.000000e-01 : f32
    %179 = vector.broadcast %cst_61 : f32 to vector<32x128xf32>
    %180 = arith.mulf %179, %178 : vector<32x128xf32>
    %181 = math.tanh %180 : vector<32x128xf32>
    %cst_62 = arith.constant 1.000000e+00 : f32
    %182 = vector.broadcast %cst_62 : f32 to vector<32x128xf32>
    %183 = arith.addf %181, %182 : vector<32x128xf32>
    %cst_63 = arith.constant 5.000000e-01 : f32
    %184 = vector.broadcast %cst_63 : f32 to vector<32x128xf32>
    %185 = arith.mulf %184, %183 : vector<32x128xf32>
    %186 = arith.mulf %175, %151 : vector<32x128xf32>
    %187 = arith.mulf %167, %177 : vector<32x128xf32>
    %188 = arith.addf %186, %187 : vector<32x128xf32>
    %189 = math.tanh %188 : vector<32x128xf32>
    %190 = arith.mulf %185, %189 : vector<32x128xf32>
    %c5_i32 = arith.constant 5 : i32
    %191 = arith.index_cast %c5_i32 : i32 to index
    %c0_64 = arith.constant 0 : index
    %c0_65 = arith.constant 0 : index
    %192 = vector.load %arg1[%191, %c0_64, %c0_65] : memref<8x16x128xf32, #tpu.memory_space<vmem>>, vector<1x16x128xf32>
    %193 = vector.shape_cast %192 : vector<1x16x128xf32> to vector<16x128xf32>
    %194 = tpu.concatenate %193, %190 in 0 : vector<16x128xf32>, vector<32x128xf32> -> vector<48x128xf32>
    %cst_66 = arith.constant dense<0.000000e+00> : vector<128x128xf32>
    %195 = tpu.matmul %0, %194, %cst_66 {dimension_numbers = #tpu.dot_dimension_numbers<[1], [0], [0], [1], [0, 0, 1, 1], [], []>} : vector<128x48xf32>, vector<48x128xf32>, vector<128x128xf32> -> vector<128x128xf32>
    %196 = arith.addf %195, %3 : vector<128x128xf32>
    %197 = vector.extract_strided_slice %196 {offsets = [0, 0], sizes = [32, 128], strides = [1, 1]} : vector<128x128xf32> to vector<32x128xf32>
    %cst_67 = arith.constant 5.000000e-01 : f32
    %198 = vector.broadcast %cst_67 : f32 to vector<32x128xf32>
    %199 = arith.mulf %198, %197 : vector<32x128xf32>
    %200 = math.tanh %199 : vector<32x128xf32>
    %cst_68 = arith.constant 1.000000e+00 : f32
    %201 = vector.broadcast %cst_68 : f32 to vector<32x128xf32>
    %202 = arith.addf %200, %201 : vector<32x128xf32>
    %cst_69 = arith.constant 5.000000e-01 : f32
    %203 = vector.broadcast %cst_69 : f32 to vector<32x128xf32>
    %204 = arith.mulf %203, %202 : vector<32x128xf32>
    %205 = vector.extract_strided_slice %196 {offsets = [32, 0], sizes = [32, 128], strides = [1, 1]} : vector<128x128xf32> to vector<32x128xf32>
    %cst_70 = arith.constant 5.000000e-01 : f32
    %206 = vector.broadcast %cst_70 : f32 to vector<32x128xf32>
    %207 = arith.mulf %206, %205 : vector<32x128xf32>
    %208 = math.tanh %207 : vector<32x128xf32>
    %cst_71 = arith.constant 1.000000e+00 : f32
    %209 = vector.broadcast %cst_71 : f32 to vector<32x128xf32>
    %210 = arith.addf %208, %209 : vector<32x128xf32>
    %cst_72 = arith.constant 5.000000e-01 : f32
    %211 = vector.broadcast %cst_72 : f32 to vector<32x128xf32>
    %212 = arith.mulf %211, %210 : vector<32x128xf32>
    %213 = vector.extract_strided_slice %196 {offsets = [64, 0], sizes = [32, 128], strides = [1, 1]} : vector<128x128xf32> to vector<32x128xf32>
    %214 = math.tanh %213 : vector<32x128xf32>
    %215 = vector.extract_strided_slice %196 {offsets = [96, 0], sizes = [32, 128], strides = [1, 1]} : vector<128x128xf32> to vector<32x128xf32>
    %cst_73 = arith.constant 5.000000e-01 : f32
    %216 = vector.broadcast %cst_73 : f32 to vector<32x128xf32>
    %217 = arith.mulf %216, %215 : vector<32x128xf32>
    %218 = math.tanh %217 : vector<32x128xf32>
    %cst_74 = arith.constant 1.000000e+00 : f32
    %219 = vector.broadcast %cst_74 : f32 to vector<32x128xf32>
    %220 = arith.addf %218, %219 : vector<32x128xf32>
    %cst_75 = arith.constant 5.000000e-01 : f32
    %221 = vector.broadcast %cst_75 : f32 to vector<32x128xf32>
    %222 = arith.mulf %221, %220 : vector<32x128xf32>
    %223 = arith.mulf %212, %188 : vector<32x128xf32>
    %224 = arith.mulf %204, %214 : vector<32x128xf32>
    %225 = arith.addf %223, %224 : vector<32x128xf32>
    %226 = math.tanh %225 : vector<32x128xf32>
    %227 = arith.mulf %222, %226 : vector<32x128xf32>
    %c6_i32 = arith.constant 6 : i32
    %228 = arith.index_cast %c6_i32 : i32 to index
    %c0_76 = arith.constant 0 : index
    %c0_77 = arith.constant 0 : index
    %229 = vector.load %arg1[%228, %c0_76, %c0_77] : memref<8x16x128xf32, #tpu.memory_space<vmem>>, vector<1x16x128xf32>
    %230 = vector.shape_cast %229 : vector<1x16x128xf32> to vector<16x128xf32>
    %231 = tpu.concatenate %230, %227 in 0 : vector<16x128xf32>, vector<32x128xf32> -> vector<48x128xf32>
    %cst_78 = arith.constant dense<0.000000e+00> : vector<128x128xf32>
    %232 = tpu.matmul %0, %231, %cst_78 {dimension_numbers = #tpu.dot_dimension_numbers<[1], [0], [0], [1], [0, 0, 1, 1], [], []>} : vector<128x48xf32>, vector<48x128xf32>, vector<128x128xf32> -> vector<128x128xf32>
    %233 = arith.addf %232, %3 : vector<128x128xf32>
    %234 = vector.extract_strided_slice %233 {offsets = [0, 0], sizes = [32, 128], strides = [1, 1]} : vector<128x128xf32> to vector<32x128xf32>
    %cst_79 = arith.constant 5.000000e-01 : f32
    %235 = vector.broadcast %cst_79 : f32 to vector<32x128xf32>
    %236 = arith.mulf %235, %234 : vector<32x128xf32>
    %237 = math.tanh %236 : vector<32x128xf32>
    %cst_80 = arith.constant 1.000000e+00 : f32
    %238 = vector.broadcast %cst_80 : f32 to vector<32x128xf32>
    %239 = arith.addf %237, %238 : vector<32x128xf32>
    %cst_81 = arith.constant 5.000000e-01 : f32
    %240 = vector.broadcast %cst_81 : f32 to vector<32x128xf32>
    %241 = arith.mulf %240, %239 : vector<32x128xf32>
    %242 = vector.extract_strided_slice %233 {offsets = [32, 0], sizes = [32, 128], strides = [1, 1]} : vector<128x128xf32> to vector<32x128xf32>
    %cst_82 = arith.constant 5.000000e-01 : f32
    %243 = vector.broadcast %cst_82 : f32 to vector<32x128xf32>
    %244 = arith.mulf %243, %242 : vector<32x128xf32>
    %245 = math.tanh %244 : vector<32x128xf32>
    %cst_83 = arith.constant 1.000000e+00 : f32
    %246 = vector.broadcast %cst_83 : f32 to vector<32x128xf32>
    %247 = arith.addf %245, %246 : vector<32x128xf32>
    %cst_84 = arith.constant 5.000000e-01 : f32
    %248 = vector.broadcast %cst_84 : f32 to vector<32x128xf32>
    %249 = arith.mulf %248, %247 : vector<32x128xf32>
    %250 = vector.extract_strided_slice %233 {offsets = [64, 0], sizes = [32, 128], strides = [1, 1]} : vector<128x128xf32> to vector<32x128xf32>
    %251 = math.tanh %250 : vector<32x128xf32>
    %252 = vector.extract_strided_slice %233 {offsets = [96, 0], sizes = [32, 128], strides = [1, 1]} : vector<128x128xf32> to vector<32x128xf32>
    %cst_85 = arith.constant 5.000000e-01 : f32
    %253 = vector.broadcast %cst_85 : f32 to vector<32x128xf32>
    %254 = arith.mulf %253, %252 : vector<32x128xf32>
    %255 = math.tanh %254 : vector<32x128xf32>
    %cst_86 = arith.constant 1.000000e+00 : f32
    %256 = vector.broadcast %cst_86 : f32 to vector<32x128xf32>
    %257 = arith.addf %255, %256 : vector<32x128xf32>
    %cst_87 = arith.constant 5.000000e-01 : f32
    %258 = vector.broadcast %cst_87 : f32 to vector<32x128xf32>
    %259 = arith.mulf %258, %257 : vector<32x128xf32>
    %260 = arith.mulf %249, %225 : vector<32x128xf32>
    %261 = arith.mulf %241, %251 : vector<32x128xf32>
    %262 = arith.addf %260, %261 : vector<32x128xf32>
    %263 = math.tanh %262 : vector<32x128xf32>
    %264 = arith.mulf %259, %263 : vector<32x128xf32>
    %c7_i32 = arith.constant 7 : i32
    %265 = arith.index_cast %c7_i32 : i32 to index
    %c0_88 = arith.constant 0 : index
    %c0_89 = arith.constant 0 : index
    %266 = vector.load %arg1[%265, %c0_88, %c0_89] : memref<8x16x128xf32, #tpu.memory_space<vmem>>, vector<1x16x128xf32>
    %267 = vector.shape_cast %266 : vector<1x16x128xf32> to vector<16x128xf32>
    %268 = tpu.concatenate %267, %264 in 0 : vector<16x128xf32>, vector<32x128xf32> -> vector<48x128xf32>
    %cst_90 = arith.constant dense<0.000000e+00> : vector<128x128xf32>
    %269 = tpu.matmul %0, %268, %cst_90 {dimension_numbers = #tpu.dot_dimension_numbers<[1], [0], [0], [1], [0, 0, 1, 1], [], []>} : vector<128x48xf32>, vector<48x128xf32>, vector<128x128xf32> -> vector<128x128xf32>
    %270 = arith.addf %269, %3 : vector<128x128xf32>
    %271 = vector.extract_strided_slice %270 {offsets = [0, 0], sizes = [32, 128], strides = [1, 1]} : vector<128x128xf32> to vector<32x128xf32>
    %cst_91 = arith.constant 5.000000e-01 : f32
    %272 = vector.broadcast %cst_91 : f32 to vector<32x128xf32>
    %273 = arith.mulf %272, %271 : vector<32x128xf32>
    %274 = math.tanh %273 : vector<32x128xf32>
    %cst_92 = arith.constant 1.000000e+00 : f32
    %275 = vector.broadcast %cst_92 : f32 to vector<32x128xf32>
    %276 = arith.addf %274, %275 : vector<32x128xf32>
    %cst_93 = arith.constant 5.000000e-01 : f32
    %277 = vector.broadcast %cst_93 : f32 to vector<32x128xf32>
    %278 = arith.mulf %277, %276 : vector<32x128xf32>
    %279 = vector.extract_strided_slice %270 {offsets = [32, 0], sizes = [32, 128], strides = [1, 1]} : vector<128x128xf32> to vector<32x128xf32>
    %cst_94 = arith.constant 5.000000e-01 : f32
    %280 = vector.broadcast %cst_94 : f32 to vector<32x128xf32>
    %281 = arith.mulf %280, %279 : vector<32x128xf32>
    %282 = math.tanh %281 : vector<32x128xf32>
    %cst_95 = arith.constant 1.000000e+00 : f32
    %283 = vector.broadcast %cst_95 : f32 to vector<32x128xf32>
    %284 = arith.addf %282, %283 : vector<32x128xf32>
    %cst_96 = arith.constant 5.000000e-01 : f32
    %285 = vector.broadcast %cst_96 : f32 to vector<32x128xf32>
    %286 = arith.mulf %285, %284 : vector<32x128xf32>
    %287 = vector.extract_strided_slice %270 {offsets = [64, 0], sizes = [32, 128], strides = [1, 1]} : vector<128x128xf32> to vector<32x128xf32>
    %288 = math.tanh %287 : vector<32x128xf32>
    %289 = vector.extract_strided_slice %270 {offsets = [96, 0], sizes = [32, 128], strides = [1, 1]} : vector<128x128xf32> to vector<32x128xf32>
    %cst_97 = arith.constant 5.000000e-01 : f32
    %290 = vector.broadcast %cst_97 : f32 to vector<32x128xf32>
    %291 = arith.mulf %290, %289 : vector<32x128xf32>
    %292 = math.tanh %291 : vector<32x128xf32>
    %cst_98 = arith.constant 1.000000e+00 : f32
    %293 = vector.broadcast %cst_98 : f32 to vector<32x128xf32>
    %294 = arith.addf %292, %293 : vector<32x128xf32>
    %cst_99 = arith.constant 5.000000e-01 : f32
    %295 = vector.broadcast %cst_99 : f32 to vector<32x128xf32>
    %296 = arith.mulf %295, %294 : vector<32x128xf32>
    %297 = arith.mulf %286, %262 : vector<32x128xf32>
    %298 = arith.mulf %278, %288 : vector<32x128xf32>
    %299 = arith.addf %297, %298 : vector<32x128xf32>
    %300 = math.tanh %299 : vector<32x128xf32>
    %301 = arith.mulf %296, %300 : vector<32x128xf32>
    %c8_i32 = arith.constant 8 : i32
    %c0_100 = arith.constant 0 : index
    %c0_101 = arith.constant 0 : index
    %302 = vector.load %arg4[%c0_100, %c0_101] : memref<32x32xf32, #tpu.memory_space<vmem>>, vector<32x32xf32>
    %cst_102 = arith.constant dense<0.000000e+00> : vector<32x128xf32>
    %303 = tpu.matmul %302, %301, %cst_102 {dimension_numbers = #tpu.dot_dimension_numbers<[1], [0], [0], [1], [0, 0, 1, 1], [], []>} : vector<32x32xf32>, vector<32x128xf32>, vector<32x128xf32> -> vector<32x128xf32>
    %c0_103 = arith.constant 0 : index
    %c0_104 = arith.constant 0 : index
    %304 = vector.load %arg5[%c0_103, %c0_104] : memref<32x1xf32, #tpu.memory_space<vmem>>, vector<32x1xf32>
    %305 = vector.broadcast %304 : vector<32x1xf32> to vector<32x128xf32>
    %306 = arith.addf %303, %305 : vector<32x128xf32>
    %cst_105 = arith.constant 0.000000e+00 : f32
    %307 = vector.broadcast %cst_105 : f32 to vector<32x128xf32>
    %308 = arith.maximumf %306, %307 : vector<32x128xf32>
    %c0_106 = arith.constant 0 : index
    %c0_107 = arith.constant 0 : index
    %309 = vector.load %arg6[%c0_106, %c0_107] : memref<8x32xf32, #tpu.memory_space<vmem>>, vector<8x32xf32>
    %cst_108 = arith.constant dense<0.000000e+00> : vector<8x128xf32>
    %310 = tpu.matmul %309, %308, %cst_108 {dimension_numbers = #tpu.dot_dimension_numbers<[1], [0], [0], [1], [0, 0, 1, 1], [], []>} : vector<8x32xf32>, vector<32x128xf32>, vector<8x128xf32> -> vector<8x128xf32>
    %c0_109 = arith.constant 0 : index
    %c0_110 = arith.constant 0 : index
    %311 = vector.load %arg7[%c0_109, %c0_110] : memref<8x1xf32, #tpu.memory_space<vmem>>, vector<8x1xf32>
    %312 = vector.broadcast %311 : vector<8x1xf32> to vector<8x128xf32>
    %313 = arith.addf %310, %312 : vector<8x128xf32>
    %cst_111 = arith.constant dense<0xFF800000> : vector<128xf32>
    %314 = vector.multi_reduction <maximumf>, %313, %cst_111 [0] : vector<8x128xf32> to vector<128xf32>
    %315 = vector.shape_cast %314 : vector<128xf32> to vector<1x128xf32>
    %316 = vector.broadcast %315 : vector<1x128xf32> to vector<8x128xf32>
    %317 = arith.subf %313, %316 : vector<8x128xf32>
    %318 = math.exp %317 : vector<8x128xf32>
    %cst_112 = arith.constant dense<0.000000e+00> : vector<128xf32>
    %319 = vector.multi_reduction <add>, %318, %cst_112 [0] : vector<8x128xf32> to vector<128xf32>
    %320 = vector.shape_cast %319 : vector<128xf32> to vector<1x128xf32>
    %321 = math.log %320 : vector<1x128xf32>
    %322 = arith.addf %315, %321 : vector<1x128xf32>
    %323 = vector.broadcast %322 : vector<1x128xf32> to vector<8x128xf32>
    %324 = arith.subf %313, %323 : vector<8x128xf32>
    %c0_113 = arith.constant 0 : index
    %c0_114 = arith.constant 0 : index
    %325 = vector.load %arg8[%c0_113, %c0_114] : memref<8x128xf32, #tpu.memory_space<vmem>>, vector<8x128xf32>
    tpu.vector_store %arg8[%c0_113, %c0_114], %324 {strides = array<i32>} : memref<8x128xf32, #tpu.memory_space<vmem>>, vector<8x128xf32>,
    return
  }
  func.func @transform_0(%arg0: i32) -> (i32, i32, i32) {
    %c0_i32 = arith.constant 0 : i32
    %c0_i32_0 = arith.constant 0 : i32
    %c0_i32_1 = arith.constant 0 : i32
    return %c0_i32, %c0_i32_0, %arg0 : i32, i32, i32
  }
  func.func @transform_1(%arg0: i32) -> (i32, i32) {
    %c0_i32 = arith.constant 0 : i32
    %c0_i32_0 = arith.constant 0 : i32
    %c0_i32_1 = arith.constant 0 : i32
    return %c0_i32, %c0_i32_0 : i32, i32
  }
  func.func @transform_2(%arg0: i32) -> (i32, i32) {
    %c0_i32 = arith.constant 0 : i32
    %c0_i32_0 = arith.constant 0 : i32
    %c0_i32_1 = arith.constant 0 : i32
    return %c0_i32, %c0_i32_0 : i32, i32
  }
  func.func @transform_3(%arg0: i32) -> (i32, i32) {
    %c0_i32 = arith.constant 0 : i32
    %c0_i32_0 = arith.constant 0 : i32
    %c0_i32_1 = arith.constant 0 : i32
    return %c0_i32, %c0_i32_0 : i32, i32
  }
  func.func @transform_4(%arg0: i32) -> (i32, i32) {
    %c0_i32 = arith.constant 0 : i32
    %c0_i32_0 = arith.constant 0 : i32
    %c0_i32_1 = arith.constant 0 : i32
    return %c0_i32, %c0_i32_0 : i32, i32
  }
  func.func @transform_5(%arg0: i32) -> (i32, i32) {
    %c0_i32 = arith.constant 0 : i32
    %c0_i32_0 = arith.constant 0 : i32
    %c0_i32_1 = arith.constant 0 : i32
    return %c0_i32, %c0_i32_0 : i32, i32
  }
  func.func @transform_6(%arg0: i32) -> (i32, i32) {
    %c0_i32 = arith.constant 0 : i32
    %c0_i32_0 = arith.constant 0 : i32
    %c0_i32_1 = arith.constant 0 : i32
    return %c0_i32, %c0_i32_0 : i32, i32
  }
  func.func @transform_7(%arg0: i32) -> (i32, i32) {
    %c0_i32 = arith.constant 0 : i32
    %c0_i32_0 = arith.constant 0 : i32
    return %c0_i32, %arg0 : i32, i32
  }
}

</mosaic_0001>

<llo_original>
// kernel: tpu_custom_call.1
$region0: #{tpu_custom_call.1}
  #allocation0 [shape = 'u32[]', space=smem, size = 0x4, offset = 0x4, fixed_abs, tag = 'smem constant byte address 0x4 - core index']
  #allocation1 [shape = 'u32[72,128]{1,0:T(1,128)}', space=vmem, size = 0x9000, scoped, tag = 'internal scratch']
  %s0 = inlined_call_operand.vmem [shape: f32[8,16,128], index: 0, kind: input, shape index: {}]
  %s1 = inlined_call_operand.vmem [shape: f32[128,48], index: 1, kind: input, shape index: {}]
  %s2 = inlined_call_operand.vmem [shape: f32[128,1], index: 2, kind: input, shape index: {}]
  %s3 = inlined_call_operand.vmem [shape: f32[32,32], index: 3, kind: input, shape index: {}]
  %s4 = inlined_call_operand.vmem [shape: f32[32,1], index: 4, kind: input, shape index: {}]
  %s5 = inlined_call_operand.vmem [shape: f32[8,32], index: 5, kind: input, shape index: {}]
  %s6 = inlined_call_operand.vmem [shape: f32[8,1], index: 6, kind: input, shape index: {}]
  %s7 = inlined_call_operand.hbm [shape: f32[8,128], index: 7, kind: output, shape index: {}]
  %s8 = sld [smem:[#allocation0]]
  $region38: #{tpu_custom_call.1} parent=0
    _
  %s10 = ssub.s32 1, %s8
  %s11 = scalar_select 0, %s10, %s8
  $region1: #{tpu_custom_call.1} parent=0
    #allocation2 [shape = 'u8[4096]{0}', space=vmem, size = 0x1000, scoped, tag = 'output window, operand 0, single buffered']
    #allocation3 [shape = 's32[1]{0}', space=sflag, size = 0x4, scoped, tag = 'scoped memory for tpu_custom_call.1']
    %12 = vsyncpa [#allocation3], 0
    // Predicated region
    $region2: #{tpu_custom_call.1} parent=1 // pred_check
      _
    $region3: #{tpu_custom_call.1} parent=1 // pred_check_branch
      %14 = sbr.rel (0) target = $region5
    $region4: #{tpu_custom_call.1} parent=1 // pred_region
      _
    $region5: #{tpu_custom_call.1} parent=1 // pred_fallthru
      _
    // Predicated region
    $region6: #{tpu_custom_call.1} parent=1 // pred_check
      _
    $region7: #{tpu_custom_call.1} parent=1 // pred_check_branch
      %16 = sbr.rel (0) target = $region9
    $region8: #{tpu_custom_call.1} parent=1 // pred_region
      _
    $region9: #{tpu_custom_call.1} parent=1 // pred_fallthru
      _
    // Predicated region
    $region10: #{tpu_custom_call.1} parent=1 // pred_check
      _
    $region11: #{tpu_custom_call.1} parent=1 // pred_check_branch
      %18 = sbr.rel (0) target = $region13
    $region12: #{tpu_custom_call.1} parent=1 // pred_region
      _
    $region13: #{tpu_custom_call.1} parent=1 // pred_fallthru
      _
    // Predicated region
    $region14: #{tpu_custom_call.1} parent=1 // pred_check
      _
    $region15: #{tpu_custom_call.1} parent=1 // pred_check_branch
      %20 = sbr.rel (0) target = $region17
    $region16: #{tpu_custom_call.1} parent=1 // pred_region
      _
    $region17: #{tpu_custom_call.1} parent=1 // pred_fallthru
      _
    // Predicated region
    $region18: #{tpu_custom_call.1} parent=1 // pred_check
      _
    $region19: #{tpu_custom_call.1} parent=1 // pred_check_branch
      %22 = sbr.rel (0) target = $region21
    $region20: #{tpu_custom_call.1} parent=1 // pred_region
      _
    $region21: #{tpu_custom_call.1} parent=1 // pred_fallthru
      _
    // Predicated region
    $region22: #{tpu_custom_call.1} parent=1 // pred_check
      _
    $region23: #{tpu_custom_call.1} parent=1 // pred_check_branch
      %24 = sbr.rel (0) target = $region25
    $region24: #{tpu_custom_call.1} parent=1 // pred_region
      _
    $region25: #{tpu_custom_call.1} parent=1 // pred_fallthru
      _
    // Predicated region
    $region26: #{tpu_custom_call.1} parent=1 // pred_check
      _
    $region27: #{tpu_custom_call.1} parent=1 // pred_check_branch
      %26 = sbr.rel (0) target = $region29
    $region28: #{tpu_custom_call.1} parent=1 // pred_region
      _
    $region29: #{tpu_custom_call.1} parent=1 // pred_fallthru
      _
    %v27 = vld [vmem:[%s1] sm:$0xff]
    %v28 = vld [vmem:[%s1 + $0x8] sm:$0xff]
    %v29 = vld [vmem:[%s1 + $0x10] sm:$0xff]
    %v30 = vld [vmem:[%s1 + $0x18] sm:$0xff]
    %v31 = vld [vmem:[%s1 + $0x20] sm:$0xff]
    %v32 = vld [vmem:[%s1 + $0x28] sm:$0xff]
    %v33 = vld [vmem:[%s1 + $0x30] sm:$0xff]
    %v34 = vld [vmem:[%s1 + $0x38] sm:$0xff]
    %v35 = vld [vmem:[%s1 + $0x40] sm:$0xff]
    %v36 = vld [vmem:[%s1 + $0x48] sm:$0xff]
    %v37 = vld [vmem:[%s1 + $0x50] sm:$0xff]
    %v38 = vld [vmem:[%s1 + $0x58] sm:$0xff]
    %v39 = vld [vmem:[%s1 + $0x60] sm:$0xff]
    %v40 = vld [vmem:[%s1 + $0x68] sm:$0xff]
    %v41 = vld [vmem:[%s1 + $0x70] sm:$0xff]
    %v42 = vld [vmem:[%s1 + $0x78] sm:$0xff]
    %v43 = vld [vmem:[%s2] sm:$0xff]
    %v44 = vld [vmem:[%s2 + $0x8] sm:$0xff]
    %v45 = vld [vmem:[%s2 + $0x10] sm:$0xff]
    %v46 = vld [vmem:[%s2 + $0x18] sm:$0xff]
    %v47 = vld [vmem:[%s2 + $0x20] sm:$0xff]
    %v48 = vld [vmem:[%s2 + $0x28] sm:$0xff]
    %v49 = vld [vmem:[%s2 + $0x30] sm:$0xff]
    %v50 = vld [vmem:[%s2 + $0x38] sm:$0xff]
    %v51 = vld [vmem:[%s2 + $0x40] sm:$0xff]
    %v52 = vld [vmem:[%s2 + $0x48] sm:$0xff]
    %v53 = vld [vmem:[%s2 + $0x50] sm:$0xff]
    %v54 = vld [vmem:[%s2 + $0x58] sm:$0xff]
    %v55 = vld [vmem:[%s2 + $0x60] sm:$0xff]
    %v56 = vld [vmem:[%s2 + $0x68] sm:$0xff]
    %v57 = vld [vmem:[%s2 + $0x70] sm:$0xff]
    %v58 = vld [vmem:[%s2 + $0x78] sm:$0xff]
    %60 = vset.pattern.permute.xlu0 0
    %61 = vperm.xlu0 %60, %v43
    %v62 = vpop.permute.xlu0 %61
    %65 = vset.pattern.permute.xlu0 0
    %66 = vperm.xlu0 %65, %v44
    %v67 = vpop.permute.xlu0 %66
    %70 = vset.pattern.permute.xlu0 0
    %71 = vperm.xlu0 %70, %v45
    %v72 = vpop.permute.xlu0 %71
    %75 = vset.pattern.permute.xlu0 0
    %76 = vperm.xlu0 %75, %v46
    %v77 = vpop.permute.xlu0 %76
    %80 = vset.pattern.permute.xlu0 0
    %81 = vperm.xlu0 %80, %v47
    %v82 = vpop.permute.xlu0 %81
    %85 = vset.pattern.permute.xlu0 0
    %86 = vperm.xlu0 %85, %v48
    %v87 = vpop.permute.xlu0 %86
    %90 = vset.pattern.permute.xlu0 0
    %91 = vperm.xlu0 %90, %v49
    %v92 = vpop.permute.xlu0 %91
    %95 = vset.pattern.permute.xlu0 0
    %96 = vperm.xlu0 %95, %v50
    %v97 = vpop.permute.xlu0 %96
    %100 = vset.pattern.permute.xlu0 0
    %101 = vperm.xlu0 %100, %v51
    %v102 = vpop.permute.xlu0 %101
    %105 = vset.pattern.permute.xlu0 0
    %106 = vperm.xlu0 %105, %v52
    %v107 = vpop.permute.xlu0 %106
    %110 = vset.pattern.permute.xlu0 0
    %111 = vperm.xlu0 %110, %v53
    %v112 = vpop.permute.xlu0 %111
    %115 = vset.pattern.permute.xlu0 0
    %116 = vperm.xlu0 %115, %v54
    %v117 = vpop.permute.xlu0 %116
    %120 = vset.pattern.permute.xlu0 0
    %121 = vperm.xlu0 %120, %v55
    %v122 = vpop.permute.xlu0 %121
    %125 = vset.pattern.permute.xlu0 0
    %126 = vperm.xlu0 %125, %v56
    %v127 = vpop.permute.xlu0 %126
    %130 = vset.pattern.permute.xlu0 0
    %131 = vperm.xlu0 %130, %v57
    %v132 = vpop.permute.xlu0 %131
    %135 = vset.pattern.permute.xlu0 0
    %136 = vperm.xlu0 %135, %v58
    %v137 = vpop.permute.xlu0 %136
    %v139 = vld [vmem:[%s0] sm:$0xff]
    %v140 = vld [vmem:[%s0 + $0x8] sm:$0xff]
    %vm141 = vcmask 392192
    %v143 = vsel %vm141, %v27, 0
    %v146 = vsel %vm141, %v28, 0
    %v149 = vsel %vm141, %v29, 0
    %v152 = vsel %vm141, %v30, 0
    %v155 = vsel %vm141, %v31, 0
    %v158 = vsel %vm141, %v32, 0
    %v161 = vsel %vm141, %v33, 0
    %v164 = vsel %vm141, %v34, 0
    %v167 = vsel %vm141, %v35, 0
    %v170 = vsel %vm141, %v36, 0
    %v173 = vsel %vm141, %v37, 0
    %v176 = vsel %vm141, %v38, 0
    %v179 = vsel %vm141, %v39, 0
    %v182 = vsel %vm141, %v40, 0
    %v185 = vsel %vm141, %v41, 0
    %v188 = vsel %vm141, %v42, 0
    %190 = vmatpush.msra.mxu0 0.0
    %191 = vmatpush.msra.mxu0 0.0
    %192 = vmatpush.msra.mxu0 0.0
    %193 = vmatpush.msra.mxu0 0.0
    %194 = vmatpush.msra.mxu0 0.0
    %195 = vmatpush.msra.mxu0 0.0
    %196 = vmatpush.msra.mxu0 0.0
    %197 = vmatpush.msra.mxu0 0.0
    %198 = vmatpush.msra.mxu0 0.0
    %199 = vmatpush.msra.mxu0 0.0
    %200 = vmatpush.msra.mxu0 0.0
    %201 = vmatpush.msra.mxu0 0.0
    %202 = vmatpush.msra.mxu0 0.0
    %203 = vmatpush.msra.mxu0 0.0
    %204 = vmatpush.msra.mxu0 %v140
    %205 = vmatpush.msra.mxu0 %v139
    %206 = vmatmul.f32.gmra.mxu0 %v143
    %v207 = vpop.f32.mrf.mxu0
    %v208 = vadd.f32 %v62, %v207
    %209 = vmatmul.f32.gmra.mxu0 %v146
    %v210 = vpop.f32.mrf.mxu0
    %v211 = vadd.f32 %v67, %v210
    %212 = vmatmul.f32.gmra.mxu0 %v149
    %v213 = vpop.f32.mrf.mxu0
    %v214 = vadd.f32 %v72, %v213
    %215 = vmatmul.f32.gmra.mxu0 %v152
    %v216 = vpop.f32.mrf.mxu0
    %v217 = vadd.f32 %v77, %v216
    %218 = vmatmul.f32.gmra.mxu0 %v155
    %v219 = vpop.f32.mrf.mxu0
    %v220 = vadd.f32 %v82, %v219
    %221 = vmatmul.f32.gmra.mxu0 %v158
    %v222 = vpop.f32.mrf.mxu0
    %v223 = vadd.f32 %v87, %v222
    %224 = vmatmul.f32.gmra.mxu0 %v161
    %v225 = vpop.f32.mrf.mxu0
    %v226 = vadd.f32 %v92, %v225
    %227 = vmatmul.f32.gmra.mxu0 %v164
    %v228 = vpop.f32.mrf.mxu0
    %v229 = vadd.f32 %v97, %v228
    %230 = vmatmul.f32.gmra.mxu0 %v167
    %v231 = vpop.f32.mrf.mxu0
    %v232 = vadd.f32 %v102, %v231
    %233 = vmatmul.f32.gmra.mxu0 %v170
    %v234 = vpop.f32.mrf.mxu0
    %v235 = vadd.f32 %v107, %v234
    %236 = vmatmul.f32.gmra.mxu0 %v173
    %v237 = vpop.f32.mrf.mxu0
    %v238 = vadd.f32 %v112, %v237
    %239 = vmatmul.f32.gmra.mxu0 %v176
    %v240 = vpop.f32.mrf.mxu0
    %v241 = vadd.f32 %v117, %v240
    %242 = vmatmul.f32.gmra.mxu0 %v179
    %v243 = vpop.f32.mrf.mxu0
    %v244 = vadd.f32 %v122, %v243
    %245 = vmatmul.f32.gmra.mxu0 %v182
    %v246 = vpop.f32.mrf.mxu0
    %v247 = vadd.f32 %v127, %v246
    %248 = vmatmul.f32.gmra.mxu0 %v185
    %v249 = vpop.f32.mrf.mxu0
    %v250 = vadd.f32 %v132, %v249
    %251 = vmatmul.f32.gmra.mxu0 %v188
    %v252 = vpop.f32.mrf.mxu0
    %v253 = vadd.f32 %v137, %v252
    %254 = vdwg.mxu0
    %v255 = vmul.f32 %v208, 0.5
    %v256 = vmul.f32 %v211, 0.5
    %v257 = vmul.f32 %v214, 0.5
    %v258 = vmul.f32 %v217, 0.5
    %v259 = vtanh.pop %v255
    %v260 = vtanh.pop %v256
    %v261 = vtanh.pop %v257
    %v262 = vtanh.pop %v258
    %v263 = vadd.f32 %v259, 1.0
    %v264 = vadd.f32 %v260, 1.0
    %v265 = vadd.f32 %v261, 1.0
    %v266 = vadd.f32 %v262, 1.0
    %v267 = vmul.f32 %v263, 0.5
    %v268 = vmul.f32 %v264, 0.5
    %v269 = vmul.f32 %v265, 0.5
    %v270 = vmul.f32 %v266, 0.5
    %v271 = vmul.f32 %v220, 0.5
    %v272 = vmul.f32 %v223, 0.5
    %v273 = vmul.f32 %v226, 0.5
    %v274 = vmul.f32 %v229, 0.5
    %v275 = vtanh.pop %v271
    %v276 = vtanh.pop %v272
    %v277 = vtanh.pop %v273
    %v278 = vtanh.pop %v274
    %v279 = vadd.f32 %v275, 1.0
    %v280 = vadd.f32 %v276, 1.0
    %v281 = vadd.f32 %v277, 1.0
    %v282 = vadd.f32 %v278, 1.0
    %v283 = vmul.f32 %v279, 0.5
    %v284 = vmul.f32 %v280, 0.5
    %v285 = vmul.f32 %v281, 0.5
    %v286 = vmul.f32 %v282, 0.5
    %v287 = vtanh.pop %v232
    %v288 = vtanh.pop %v235
    %v289 = vtanh.pop %v238
    %v290 = vtanh.pop %v241
    %v291 = vmul.f32 %v244, 0.5
    %v292 = vmul.f32 %v247, 0.5
    %v293 = vmul.f32 %v250, 0.5
    %v294 = vmul.f32 %v253, 0.5
    %v295 = vtanh.pop %v291
    %v296 = vtanh.pop %v292
    %v297 = vtanh.pop %v293
    %v298 = vtanh.pop %v294
    %v299 = vadd.f32 %v295, 1.0
    %v300 = vadd.f32 %v296, 1.0
    %v301 = vadd.f32 %v297, 1.0
    %v302 = vadd.f32 %v298, 1.0
    %v303 = vmul.f32 %v299, 0.5
    %v304 = vmul.f32 %v300, 0.5
    %v305 = vmul.f32 %v301, 0.5
    %v306 = vmul.f32 %v302, 0.5
    %v307 = vmul.f32 %v283, 0.0
    %v308 = vmul.f32 %v284, 0.0
    %v309 = vmul.f32 %v285, 0.0
    %v310 = vmul.f32 %v286, 0.0
    %v311 = vmul.f32 %v267, %v287
    %v312 = vmul.f32 %v268, %v288
    %v313 = vmul.f32 %v269, %v289
    %v314 = vmul.f32 %v270, %v290
    %v315 = vadd.f32 %v307, %v311
    %v316 = vadd.f32 %v308, %v312
    %v317 = vadd.f32 %v309, %v313
    %v318 = vadd.f32 %v310, %v314
    %v319 = vtanh.pop %v315
    %v320 = vtanh.pop %v316
    %v321 = vtanh.pop %v317
    %v322 = vtanh.pop %v318
    %v323 = vmul.f32 %v303, %v319
    %v324 = vmul.f32 %v304, %v320
    %v325 = vmul.f32 %v305, %v321
    %v326 = vmul.f32 %v306, %v322
    %s327 = scalar_lea.vmem %s0, 16
    %v328 = vld [vmem:[%s327] sm:$0xff]
    %v329 = vld [vmem:[%s327 + $0x8] sm:$0xff]
    %330 = vmatpush.msra.mxu0 0.0
    %331 = vmatpush.msra.mxu0 0.0
    %332 = vmatpush.msra.mxu0 0.0
    %333 = vmatpush.msra.mxu0 0.0
    %334 = vmatpush.msra.mxu0 0.0
    %335 = vmatpush.msra.mxu0 0.0
    %336 = vmatpush.msra.mxu0 0.0
    %337 = vmatpush.msra.mxu0 0.0
    %338 = vmatpush.msra.mxu0 0.0
    %339 = vmatpush.msra.mxu0 0.0
    %340 = vmatpush.msra.mxu0 %v326
    %341 = vmatpush.msra.mxu0 %v325
    %342 = vmatpush.msra.mxu0 %v324
    %343 = vmatpush.msra.mxu0 %v323
    %344 = vmatpush.msra.mxu0 %v329
    %345 = vmatpush.msra.mxu0 %v328
    %346 = vmatmul.f32.gmra.mxu0 %v143
    %v347 = vpop.f32.mrf.mxu0
    %v348 = vadd.f32 %v62, %v347
    %349 = vmatmul.f32.gmra.mxu0 %v146
    %v350 = vpop.f32.mrf.mxu0
    %v351 = vadd.f32 %v67, %v350
    %352 = vmatmul.f32.gmra.mxu0 %v149
    %v353 = vpop.f32.mrf.mxu0
    %v354 = vadd.f32 %v72, %v353
    %355 = vmatmul.f32.gmra.mxu0 %v152
    %v356 = vpop.f32.mrf.mxu0
    %v357 = vadd.f32 %v77, %v356
    %358 = vmatmul.f32.gmra.mxu0 %v155
    %v359 = vpop.f32.mrf.mxu0
    %v360 = vadd.f32 %v82, %v359
    %361 = vmatmul.f32.gmra.mxu0 %v158
    %v362 = vpop.f32.mrf.mxu0
    %v363 = vadd.f32 %v87, %v362
    %364 = vmatmul.f32.gmra.mxu0 %v161
    %v365 = vpop.f32.mrf.mxu0
    %v366 = vadd.f32 %v92, %v365
    %367 = vmatmul.f32.gmra.mxu0 %v164
    %v368 = vpop.f32.mrf.mxu0
    %v369 = vadd.f32 %v97, %v368
    %370 = vmatmul.f32.gmra.mxu0 %v167
    %v371 = vpop.f32.mrf.mxu0
    %v372 = vadd.f32 %v102, %v371
    %373 = vmatmul.f32.gmra.mxu0 %v170
    %v374 = vpop.f32.mrf.mxu0
    %v375 = vadd.f32 %v107, %v374
    %376 = vmatmul.f32.gmra.mxu0 %v173
    %v377 = vpop.f32.mrf.mxu0
    %v378 = vadd.f32 %v112, %v377
    %379 = vmatmul.f32.gmra.mxu0 %v176
    %v380 = vpop.f32.mrf.mxu0
    %v381 = vadd.f32 %v117, %v380
    %382 = vmatmul.f32.gmra.mxu0 %v179
    %v383 = vpop.f32.mrf.mxu0
    %v384 = vadd.f32 %v122, %v383
    %385 = vmatmul.f32.gmra.mxu0 %v182
    %v386 = vpop.f32.mrf.mxu0
    %v387 = vadd.f32 %v127, %v386
    %388 = vmatmul.f32.gmra.mxu0 %v185
    %v389 = vpop.f32.mrf.mxu0
    %v390 = vadd.f32 %v132, %v389
    %391 = vmatmul.f32.gmra.mxu0 %v188
    %v392 = vpop.f32.mrf.mxu0
    %v393 = vadd.f32 %v137, %v392
    %394 = vdwg.mxu0
    %v395 = vmul.f32 %v348, 0.5
    %v396 = vmul.f32 %v351, 0.5
    %v397 = vmul.f32 %v354, 0.5
    %v398 = vmul.f32 %v357, 0.5
    %v399 = vtanh.pop %v395
    %v400 = vtanh.pop %v396
    %v401 = vtanh.pop %v397
    %v402 = vtanh.pop %v398
    %v403 = vadd.f32 %v399, 1.0
    %v404 = vadd.f32 %v400, 1.0
    %v405 = vadd.f32 %v401, 1.0
    %v406 = vadd.f32 %v402, 1.0
    %v407 = vmul.f32 %v403, 0.5
    %v408 = vmul.f32 %v404, 0.5
    %v409 = vmul.f32 %v405, 0.5
    %v410 = vmul.f32 %v406, 0.5
    %v411 = vmul.f32 %v360, 0.5
    %v412 = vmul.f32 %v363, 0.5
    %v413 = vmul.f32 %v366, 0.5
    %v414 = vmul.f32 %v369, 0.5
    %v415 = vtanh.pop %v411
    %v416 = vtanh.pop %v412
    %v417 = vtanh.pop %v413
    %v418 = vtanh.pop %v414
    %v419 = vadd.f32 %v415, 1.0
    %v420 = vadd.f32 %v416, 1.0
    %v421 = vadd.f32 %v417, 1.0
    %v422 = vadd.f32 %v418, 1.0
    %v423 = vmul.f32 %v419, 0.5
    %v424 = vmul.f32 %v420, 0.5
    %v425 = vmul.f32 %v421, 0.5
    %v426 = vmul.f32 %v422, 0.5
    %v427 = vtanh.pop %v372
    %v428 = vtanh.pop %v375
    %v429 = vtanh.pop %v378
    %v430 = vtanh.pop %v381
    %v431 = vmul.f32 %v384, 0.5
    %v432 = vmul.f32 %v387, 0.5
    %v433 = vmul.f32 %v390, 0.5
    %v434 = vmul.f32 %v393, 0.5
    %v435 = vtanh.pop %v431
    %v436 = vtanh.pop %v432
    %v437 = vtanh.pop %v433
    %v438 = vtanh.pop %v434
    %v439 = vadd.f32 %v435, 1.0
    %v440 = vadd.f32 %v436, 1.0
    %v441 = vadd.f32 %v437, 1.0
    %v442 = vadd.f32 %v438, 1.0
    %v443 = vmul.f32 %v439, 0.5
    %v444 = vmul.f32 %v440, 0.5
    %v445 = vmul.f32 %v441, 0.5
    %v446 = vmul.f32 %v442, 0.5
    %v447 = vmul.f32 %v423, %v315
    %v448 = vmul.f32 %v424, %v316
    %v449 = vmul.f32 %v425, %v317
    %v450 = vmul.f32 %v426, %v318
    %v451 = vmul.f32 %v407, %v427
    %v452 = vmul.f32 %v408, %v428
    %v453 = vmul.f32 %v409, %v429
    %v454 = vmul.f32 %v410, %v430
    %v455 = vadd.f32 %v447, %v451
    %v456 = vadd.f32 %v448, %v452
    %v457 = vadd.f32 %v449, %v453
    %v458 = vadd.f32 %v450, %v454
    %v459 = vtanh.pop %v455
    %v460 = vtanh.pop %v456
    %v461 = vtanh.pop %v457
    %v462 = vtanh.pop %v458
    %v463 = vmul.f32 %v443, %v459
    %v464 = vmul.f32 %v444, %v460
    %v465 = vmul.f32 %v445, %v461
    %v466 = vmul.f32 %v446, %v462
    %s467 = scalar_lea.vmem %s0, 32
    %v468 = vld [vmem:[%s467] sm:$0xff]
    %v469 = vld [vmem:[%s467 + $0x8] sm:$0xff]
    %470 = vmatpush.msra.mxu0 0.0
    %471 = vmatpush.msra.mxu0 0.0
    %472 = vmatpush.msra.mxu0 0.0
    %473 = vmatpush.msra.mxu0 0.0
    %474 = vmatpush.msra.mxu0 0.0
    %475 = vmatpush.msra.mxu0 0.0
    %476 = vmatpush.msra.mxu0 0.0
    %477 = vmatpush.msra.mxu0 0.0
    %478 = vmatpush.msra.mxu0 0.0
    %479 = vmatpush.msra.mxu0 0.0
    %480 = vmatpush.msra.mxu0 %v466
    %481 = vmatpush.msra.mxu0 %v465
    %482 = vmatpush.msra.mxu0 %v464
    %483 = vmatpush.msra.mxu0 %v463
    %484 = vmatpush.msra.mxu0 %v469
    %485 = vmatpush.msra.mxu0 %v468
    %486 = vmatmul.f32.gmra.mxu0 %v143
    %v487 = vpop.f32.mrf.mxu0
    %v488 = vadd.f32 %v62, %v487
    %489 = vmatmul.f32.gmra.mxu0 %v146
    %v490 = vpop.f32.mrf.mxu0
    %v491 = vadd.f32 %v67, %v490
    %492 = vmatmul.f32.gmra.mxu0 %v149
    %v493 = vpop.f32.mrf.mxu0
    %v494 = vadd.f32 %v72, %v493
    %495 = vmatmul.f32.gmra.mxu0 %v152
    %v496 = vpop.f32.mrf.mxu0
    %v497 = vadd.f32 %v77, %v496
    %498 = vmatmul.f32.gmra.mxu0 %v155
    %v499 = vpop.f32.mrf.mxu0
    %v500 = vadd.f32 %v82, %v499
    %501 = vmatmul.f32.gmra.mxu0 %v158
    %v502 = vpop.f32.mrf.mxu0
    %v503 = vadd.f32 %v87, %v502
    %504 = vmatmul.f32.gmra.mxu0 %v161
    %v505 = vpop.f32.mrf.mxu0
    %v506 = vadd.f32 %v92, %v505
    %507 = vmatmul.f32.gmra.mxu0 %v164
    %v508 = vpop.f32.mrf.mxu0
    %v509 = vadd.f32 %v97, %v508
    %510 = vmatmul.f32.gmra.mxu0 %v167
    %v511 = vpop.f32.mrf.mxu0
    %v512 = vadd.f32 %v102, %v511
    %513 = vmatmul.f32.gmra.mxu0 %v170
    %v514 = vpop.f32.mrf.mxu0
    %v515 = vadd.f32 %v107, %v514
    %516 = vmatmul.f32.gmra.mxu0 %v173
    %v517 = vpop.f32.mrf.mxu0
    %v518 = vadd.f32 %v112, %v517
    %519 = vmatmul.f32.gmra.mxu0 %v176
    %v520 = vpop.f32.mrf.mxu0
    %v521 = vadd.f32 %v117, %v520
    %522 = vmatmul.f32.gmra.mxu0 %v179
    %v523 = vpop.f32.mrf.mxu0
    %v524 = vadd.f32 %v122, %v523
    %525 = vmatmul.f32.gmra.mxu0 %v182
    %v526 = vpop.f32.mrf.mxu0
    %v527 = vadd.f32 %v127, %v526
    %528 = vmatmul.f32.gmra.mxu0 %v185
    %v529 = vpop.f32.mrf.mxu0
    %v530 = vadd.f32 %v132, %v529
    %531 = vmatmul.f32.gmra.mxu0 %v188
    %v532 = vpop.f32.mrf.mxu0
    %v533 = vadd.f32 %v137, %v532
    %534 = vdwg.mxu0
    %v535 = vmul.f32 %v488, 0.5
    %v536 = vmul.f32 %v491, 0.5
    %v537 = vmul.f32 %v494, 0.5
    %v538 = vmul.f32 %v497, 0.5
    %v539 = vtanh.pop %v535
    %v540 = vtanh.pop %v536
    %v541 = vtanh.pop %v537
    %v542 = vtanh.pop %v538
    %v543 = vadd.f32 %v539, 1.0
    %v544 = vadd.f32 %v540, 1.0
    %v545 = vadd.f32 %v541, 1.0
    %v546 = vadd.f32 %v542, 1.0
    %v547 = vmul.f32 %v543, 0.5
    %v548 = vmul.f32 %v544, 0.5
    %v549 = vmul.f32 %v545, 0.5
    %v550 = vmul.f32 %v546, 0.5
    %v551 = vmul.f32 %v500, 0.5
    %v552 = vmul.f32 %v503, 0.5
    %v553 = vmul.f32 %v506, 0.5
    %v554 = vmul.f32 %v509, 0.5
    %v555 = vtanh.pop %v551
    %v556 = vtanh.pop %v552
    %v557 = vtanh.pop %v553
    %v558 = vtanh.pop %v554
    %v559 = vadd.f32 %v555, 1.0
    %v560 = vadd.f32 %v556, 1.0
    %v561 = vadd.f32 %v557, 1.0
    %v562 = vadd.f32 %v558, 1.0
    %v563 = vmul.f32 %v559, 0.5
    %v564 = vmul.f32 %v560, 0.5
    %v565 = vmul.f32 %v561, 0.5
    %v566 = vmul.f32 %v562, 0.5
    %v567 = vtanh.pop %v512
    %v568 = vtanh.pop %v515
    %v569 = vtanh.pop %v518
    %v570 = vtanh.pop %v521
    %v571 = vmul.f32 %v524, 0.5
    %v572 = vmul.f32 %v527, 0.5
    %v573 = vmul.f32 %v530, 0.5
    %v574 = vmul.f32 %v533, 0.5
    %v575 = vtanh.pop %v571
    %v576 = vtanh.pop %v572
    %v577 = vtanh.pop %v573
    %v578 = vtanh.pop %v574
    %v579 = vadd.f32 %v575, 1.0
    %v580 = vadd.f32 %v576, 1.0
    %v581 = vadd.f32 %v577, 1.0
    %v582 = vadd.f32 %v578, 1.0
    %v583 = vmul.f32 %v579, 0.5
    %v584 = vmul.f32 %v580, 0.5
    %v585 = vmul.f32 %v581, 0.5
    %v586 = vmul.f32 %v582, 0.5
    %v587 = vmul.f32 %v563, %v455
    %v588 = vmul.f32 %v564, %v456
    %v589 = vmul.f32 %v565, %v457
    %v590 = vmul.f32 %v566, %v458
    %v591 = vmul.f32 %v547, %v567
    %v592 = vmul.f32 %v548, %v568
    %v593 = vmul.f32 %v549, %v569
    %v594 = vmul.f32 %v550, %v570
    %v595 = vadd.f32 %v587, %v591
    %v596 = vadd.f32 %v588, %v592
    %v597 = vadd.f32 %v589, %v593
    %v598 = vadd.f32 %v590, %v594
    %v599 = vtanh.pop %v595
    %v600 = vtanh.pop %v596
    %v601 = vtanh.pop %v597
    %v602 = vtanh.pop %v598
    %v603 = vmul.f32 %v583, %v599
    %v604 = vmul.f32 %v584, %v600
    %v605 = vmul.f32 %v585, %v601
    %v606 = vmul.f32 %v586, %v602
    %s607 = scalar_lea.vmem %s0, 48
    %v608 = vld [vmem:[%s607] sm:$0xff]
    %v609 = vld [vmem:[%s607 + $0x8] sm:$0xff]
    %610 = vmatpush.msra.mxu0 0.0
    %611 = vmatpush.msra.mxu0 0.0
    %612 = vmatpush.msra.mxu0 0.0
    %613 = vmatpush.msra.mxu0 0.0
    %614 = vmatpush.msra.mxu0 0.0
    %615 = vmatpush.msra.mxu0 0.0
    %616 = vmatpush.msra.mxu0 0.0
    %617 = vmatpush.msra.mxu0 0.0
    %618 = vmatpush.msra.mxu0 0.0
    %619 = vmatpush.msra.mxu0 0.0
    %620 = vmatpush.msra.mxu0 %v606
    %621 = vmatpush.msra.mxu0 %v605
    %622 = vmatpush.msra.mxu0 %v604
    %623 = vmatpush.msra.mxu0 %v603
    %624 = vmatpush.msra.mxu0 %v609
    %625 = vmatpush.msra.mxu0 %v608
    %626 = vmatmul.f32.gmra.mxu0 %v143
    %v627 = vpop.f32.mrf.mxu0
    %v628 = vadd.f32 %v62, %v627
    %629 = vmatmul.f32.gmra.mxu0 %v146
    %v630 = vpop.f32.mrf.mxu0
    %v631 = vadd.f32 %v67, %v630
    %632 = vmatmul.f32.gmra.mxu0 %v149
    %v633 = vpop.f32.mrf.mxu0
    %v634 = vadd.f32 %v72, %v633
    %635 = vmatmul.f32.gmra.mxu0 %v152
    %v636 = vpop.f32.mrf.mxu0
    %v637 = vadd.f32 %v77, %v636
    %638 = vmatmul.f32.gmra.mxu0 %v155
    %v639 = vpop.f32.mrf.mxu0
    %v640 = vadd.f32 %v82, %v639
    %641 = vmatmul.f32.gmra.mxu0 %v158
    %v642 = vpop.f32.mrf.mxu0
    %v643 = vadd.f32 %v87, %v642
    %644 = vmatmul.f32.gmra.mxu0 %v161
    %v645 = vpop.f32.mrf.mxu0
    %v646 = vadd.f32 %v92, %v645
    %647 = vmatmul.f32.gmra.mxu0 %v164
    %v648 = vpop.f32.mrf.mxu0
    %v649 = vadd.f32 %v97, %v648
    %650 = vmatmul.f32.gmra.mxu0 %v167
    %v651 = vpop.f32.mrf.mxu0
    %v652 = vadd.f32 %v102, %v651
    %653 = vmatmul.f32.gmra.mxu0 %v170
    %v654 = vpop.f32.mrf.mxu0
    %v655 = vadd.f32 %v107, %v654
    %656 = vmatmul.f32.gmra.mxu0 %v173
    %v657 = vpop.f32.mrf.mxu0
    %v658 = vadd.f32 %v112, %v657
    %659 = vmatmul.f32.gmra.mxu0 %v176
    %v660 = vpop.f32.mrf.mxu0
    %v661 = vadd.f32 %v117, %v660
    %662 = vmatmul.f32.gmra.mxu0 %v179
    %v663 = vpop.f32.mrf.mxu0
    %v664 = vadd.f32 %v122, %v663
    %665 = vmatmul.f32.gmra.mxu0 %v182
    %v666 = vpop.f32.mrf.mxu0
    %v667 = vadd.f32 %v127, %v666
    %668 = vmatmul.f32.gmra.mxu0 %v185
    %v669 = vpop.f32.mrf.mxu0
    %v670 = vadd.f32 %v132, %v669
    %671 = vmatmul.f32.gmra.mxu0 %v188
    %v672 = vpop.f32.mrf.mxu0
    %v673 = vadd.f32 %v137, %v672
    %674 = vdwg.mxu0
    %v675 = vmul.f32 %v628, 0.5
    %v676 = vmul.f32 %v631, 0.5
    %v677 = vmul.f32 %v634, 0.5
    %v678 = vmul.f32 %v637, 0.5
    %v679 = vtanh.pop %v675
    %v680 = vtanh.pop %v676
    %v681 = vtanh.pop %v677
    %v682 = vtanh.pop %v678
    %v683 = vadd.f32 %v679, 1.0
    %v684 = vadd.f32 %v680, 1.0
    %v685 = vadd.f32 %v681, 1.0
    %v686 = vadd.f32 %v682, 1.0
    %v687 = vmul.f32 %v683, 0.5
    %v688 = vmul.f32 %v684, 0.5
    %v689 = vmul.f32 %v685, 0.5
    %v690 = vmul.f32 %v686, 0.5
    %v691 = vmul.f32 %v640, 0.5
    %v692 = vmul.f32 %v643, 0.5
    %v693 = vmul.f32 %v646, 0.5
    %v694 = vmul.f32 %v649, 0.5
    %v695 = vtanh.pop %v691
    %v696 = vtanh.pop %v692
    %v697 = vtanh.pop %v693
    %v698 = vtanh.pop %v694
    %v699 = vadd.f32 %v695, 1.0
    %v700 = vadd.f32 %v696, 1.0
    %v701 = vadd.f32 %v697, 1.0
    %v702 = vadd.f32 %v698, 1.0
    %v703 = vmul.f32 %v699, 0.5
    %v704 = vmul.f32 %v700, 0.5
    %v705 = vmul.f32 %v701, 0.5
    %v706 = vmul.f32 %v702, 0.5
    %v707 = vtanh.pop %v652
    %v708 = vtanh.pop %v655
    %v709 = vtanh.pop %v658
    %v710 = vtanh.pop %v661
    %v711 = vmul.f32 %v664, 0.5
    %v712 = vmul.f32 %v667, 0.5
    %v713 = vmul.f32 %v670, 0.5
    %v714 = vmul.f32 %v673, 0.5
    %v715 = vtanh.pop %v711
    %v716 = vtanh.pop %v712
    %v717 = vtanh.pop %v713
    %v718 = vtanh.pop %v714
    %v719 = vadd.f32 %v715, 1.0
    %v720 = vadd.f32 %v716, 1.0
    %v721 = vadd.f32 %v717, 1.0
    %v722 = vadd.f32 %v718, 1.0
    %v723 = vmul.f32 %v719, 0.5
    %v724 = vmul.f32 %v720, 0.5
    %v725 = vmul.f32 %v721, 0.5
    %v726 = vmul.f32 %v722, 0.5
    %v727 = vmul.f32 %v703, %v595
    %v728 = vmul.f32 %v704, %v596
    %v729 = vmul.f32 %v705, %v597
    %v730 = vmul.f32 %v706, %v598
    %v731 = vmul.f32 %v687, %v707
    %v732 = vmul.f32 %v688, %v708
    %v733 = vmul.f32 %v689, %v709
    %v734 = vmul.f32 %v690, %v710
    %v735 = vadd.f32 %v727, %v731
    %v736 = vadd.f32 %v728, %v732
    %v737 = vadd.f32 %v729, %v733
    %v738 = vadd.f32 %v730, %v734
    %v739 = vtanh.pop %v735
    %v740 = vtanh.pop %v736
    %v741 = vtanh.pop %v737
    %v742 = vtanh.pop %v738
    %v743 = vmul.f32 %v723, %v739
    %v744 = vmul.f32 %v724, %v740
    %v745 = vmul.f32 %v725, %v741
    %v746 = vmul.f32 %v726, %v742
    %s747 = scalar_lea.vmem %s0, 64
    %v748 = vld [vmem:[%s747] sm:$0xff]
    %v749 = vld [vmem:[%s747 + $0x8] sm:$0xff]
    %750 = vmatpush.msra.mxu0 0.0
    %751 = vmatpush.msra.mxu0 0.0
    %752 = vmatpush.msra.mxu0 0.0
    %753 = vmatpush.msra.mxu0 0.0
    %754 = vmatpush.msra.mxu0 0.0
    %755 = vmatpush.msra.mxu0 0.0
    %756 = vmatpush.msra.mxu0 0.0
    %757 = vmatpush.msra.mxu0 0.0
    %758 = vmatpush.msra.mxu0 0.0
    %759 = vmatpush.msra.mxu0 0.0
    %760 = vmatpush.msra.mxu0 %v746
    %761 = vmatpush.msra.mxu0 %v745
    %762 = vmatpush.msra.mxu0 %v744
    %763 = vmatpush.msra.mxu0 %v743
    %764 = vmatpush.msra.mxu0 %v749
    %765 = vmatpush.msra.mxu0 %v748
    %766 = vmatmul.f32.gmra.mxu0 %v143
    %v767 = vpop.f32.mrf.mxu0
    %v768 = vadd.f32 %v62, %v767
    %769 = vmatmul.f32.gmra.mxu0 %v146
    %v770 = vpop.f32.mrf.mxu0
    %v771 = vadd.f32 %v67, %v770
    %772 = vmatmul.f32.gmra.mxu0 %v149
    %v773 = vpop.f32.mrf.mxu0
    %v774 = vadd.f32 %v72, %v773
    %775 = vmatmul.f32.gmra.mxu0 %v152
    %v776 = vpop.f32.mrf.mxu0
    %v777 = vadd.f32 %v77, %v776
    %778 = vmatmul.f32.gmra.mxu0 %v155
    %v779 = vpop.f32.mrf.mxu0
    %v780 = vadd.f32 %v82, %v779
    %781 = vmatmul.f32.gmra.mxu0 %v158
    %v782 = vpop.f32.mrf.mxu0
    %v783 = vadd.f32 %v87, %v782
    %784 = vmatmul.f32.gmra.mxu0 %v161
    %v785 = vpop.f32.mrf.mxu0
    %v786 = vadd.f32 %v92, %v785
    %787 = vmatmul.f32.gmra.mxu0 %v164
    %v788 = vpop.f32.mrf.mxu0
    %v789 = vadd.f32 %v97, %v788
    %790 = vmatmul.f32.gmra.mxu0 %v167
    %v791 = vpop.f32.mrf.mxu0
    %v792 = vadd.f32 %v102, %v791
    %793 = vmatmul.f32.gmra.mxu0 %v170
    %v794 = vpop.f32.mrf.mxu0
    %v795 = vadd.f32 %v107, %v794
    %796 = vmatmul.f32.gmra.mxu0 %v173
    %v797 = vpop.f32.mrf.mxu0
    %v798 = vadd.f32 %v112, %v797
    %799 = vmatmul.f32.gmra.mxu0 %v176
    %v800 = vpop.f32.mrf.mxu0
    %v801 = vadd.f32 %v117, %v800
    %802 = vmatmul.f32.gmra.mxu0 %v179
    %v803 = vpop.f32.mrf.mxu0
    %v804 = vadd.f32 %v122, %v803
    %805 = vmatmul.f32.gmra.mxu0 %v182
    %v806 = vpop.f32.mrf.mxu0
    %v807 = vadd.f32 %v127, %v806
    %808 = vmatmul.f32.gmra.mxu0 %v185
    %v809 = vpop.f32.mrf.mxu0
    %v810 = vadd.f32 %v132, %v809
    %811 = vmatmul.f32.gmra.mxu0 %v188
    %v812 = vpop.f32.mrf.mxu0
    %v813 = vadd.f32 %v137, %v812
    %814 = vdwg.mxu0
    %v815 = vmul.f32 %v768, 0.5
    %v816 = vmul.f32 %v771, 0.5
    %v817 = vmul.f32 %v774, 0.5
    %v818 = vmul.f32 %v777, 0.5
    %v819 = vtanh.pop %v815
    %v820 = vtanh.pop %v816
    %v821 = vtanh.pop %v817
    %v822 = vtanh.pop %v818
    %v823 = vadd.f32 %v819, 1.0
    %v824 = vadd.f32 %v820, 1.0
    %v825 = vadd.f32 %v821, 1.0
    %v826 = vadd.f32 %v822, 1.0
    %v827 = vmul.f32 %v823, 0.5
    %v828 = vmul.f32 %v824, 0.5
    %v829 = vmul.f32 %v825, 0.5
    %v830 = vmul.f32 %v826, 0.5
    %v831 = vmul.f32 %v780, 0.5
    %v832 = vmul.f32 %v783, 0.5
    %v833 = vmul.f32 %v786, 0.5
    %v834 = vmul.f32 %v789, 0.5
    %v835 = vtanh.pop %v831
    %v836 = vtanh.pop %v832
    %v837 = vtanh.pop %v833
    %v838 = vtanh.pop %v834
    %v839 = vadd.f32 %v835, 1.0
    %v840 = vadd.f32 %v836, 1.0
    %v841 = vadd.f32 %v837, 1.0
    %v842 = vadd.f32 %v838, 1.0
    %v843 = vmul.f32 %v839, 0.5
    %v844 = vmul.f32 %v840, 0.5
    %v845 = vmul.f32 %v841, 0.5
    %v846 = vmul.f32 %v842, 0.5
    %v847 = vtanh.pop %v792
    %v848 = vtanh.pop %v795
    %v849 = vtanh.pop %v798
    %v850 = vtanh.pop %v801
    %v851 = vmul.f32 %v804, 0.5
    %v852 = vmul.f32 %v807, 0.5
    %v853 = vmul.f32 %v810, 0.5
    %v854 = vmul.f32 %v813, 0.5
    %v855 = vtanh.pop %v851
    %v856 = vtanh.pop %v852
    %v857 = vtanh.pop %v853
    %v858 = vtanh.pop %v854
    %v859 = vadd.f32 %v855, 1.0
    %v860 = vadd.f32 %v856, 1.0
    %v861 = vadd.f32 %v857, 1.0
    %v862 = vadd.f32 %v858, 1.0
    %v863 = vmul.f32 %v859, 0.5
    %v864 = vmul.f32 %v860, 0.5
    %v865 = vmul.f32 %v861, 0.5
    %v866 = vmul.f32 %v862, 0.5
    %v867 = vmul.f32 %v843, %v735
    %v868 = vmul.f32 %v844, %v736
    %v869 = vmul.f32 %v845, %v737
    %v870 = vmul.f32 %v846, %v738
    %v871 = vmul.f32 %v827, %v847
    %v872 = vmul.f32 %v828, %v848
    %v873 = vmul.f32 %v829, %v849
    %v874 = vmul.f32 %v830, %v850
    %v875 = vadd.f32 %v867, %v871
    %v876 = vadd.f32 %v868, %v872
    %v877 = vadd.f32 %v869, %v873
    %v878 = vadd.f32 %v870, %v874
    %v879 = vtanh.pop %v875
    %v880 = vtanh.pop %v876
    %v881 = vtanh.pop %v877
    %v882 = vtanh.pop %v878
    %v883 = vmul.f32 %v863, %v879
    %v884 = vmul.f32 %v864, %v880
    %v885 = vmul.f32 %v865, %v881
    %v886 = vmul.f32 %v866, %v882
    %s887 = scalar_lea.vmem %s0, 80
    %v888 = vld [vmem:[%s887] sm:$0xff]
    %v889 = vld [vmem:[%s887 + $0x8] sm:$0xff]
    %890 = vmatpush.msra.mxu0 0.0
    %891 = vmatpush.msra.mxu0 0.0
    %892 = vmatpush.msra.mxu0 0.0
    %893 = vmatpush.msra.mxu0 0.0
    %894 = vmatpush.msra.mxu0 0.0
    %895 = vmatpush.msra.mxu0 0.0
    %896 = vmatpush.msra.mxu0 0.0
    %897 = vmatpush.msra.mxu0 0.0
    %898 = vmatpush.msra.mxu0 0.0
    %899 = vmatpush.msra.mxu0 0.0
    %900 = vmatpush.msra.mxu0 %v886
    %901 = vmatpush.msra.mxu0 %v885
    %902 = vmatpush.msra.mxu0 %v884
    %903 = vmatpush.msra.mxu0 %v883
    %904 = vmatpush.msra.mxu0 %v889
    %905 = vmatpush.msra.mxu0 %v888
    %906 = vmatmul.f32.gmra.mxu0 %v143
    %v907 = vpop.f32.mrf.mxu0
    %v908 = vadd.f32 %v62, %v907
    %909 = vmatmul.f32.gmra.mxu0 %v146
    %v910 = vpop.f32.mrf.mxu0
    %v911 = vadd.f32 %v67, %v910
    %912 = vmatmul.f32.gmra.mxu0 %v149
    %v913 = vpop.f32.mrf.mxu0
    %v914 = vadd.f32 %v72, %v913
    %915 = vmatmul.f32.gmra.mxu0 %v152
    %v916 = vpop.f32.mrf.mxu0
    %v917 = vadd.f32 %v77, %v916
    %918 = vmatmul.f32.gmra.mxu0 %v155
    %v919 = vpop.f32.mrf.mxu0
    %v920 = vadd.f32 %v82, %v919
    %921 = vmatmul.f32.gmra.mxu0 %v158
    %v922 = vpop.f32.mrf.mxu0
    %v923 = vadd.f32 %v87, %v922
    %924 = vmatmul.f32.gmra.mxu0 %v161
    %v925 = vpop.f32.mrf.mxu0
    %v926 = vadd.f32 %v92, %v925
    %927 = vmatmul.f32.gmra.mxu0 %v164
    %v928 = vpop.f32.mrf.mxu0
    %v929 = vadd.f32 %v97, %v928
    %930 = vmatmul.f32.gmra.mxu0 %v167
    %v931 = vpop.f32.mrf.mxu0
    %v932 = vadd.f32 %v102, %v931
    %933 = vmatmul.f32.gmra.mxu0 %v170
    %v934 = vpop.f32.mrf.mxu0
    %v935 = vadd.f32 %v107, %v934
    %936 = vmatmul.f32.gmra.mxu0 %v173
    %v937 = vpop.f32.mrf.mxu0
    %v938 = vadd.f32 %v112, %v937
    %939 = vmatmul.f32.gmra.mxu0 %v176
    %v940 = vpop.f32.mrf.mxu0
    %v941 = vadd.f32 %v117, %v940
    %942 = vmatmul.f32.gmra.mxu0 %v179
    %v943 = vpop.f32.mrf.mxu0
    %v944 = vadd.f32 %v122, %v943
    %945 = vmatmul.f32.gmra.mxu0 %v182
    %v946 = vpop.f32.mrf.mxu0
    %v947 = vadd.f32 %v127, %v946
    %948 = vmatmul.f32.gmra.mxu0 %v185
    %v949 = vpop.f32.mrf.mxu0
    %v950 = vadd.f32 %v132, %v949
    %951 = vmatmul.f32.gmra.mxu0 %v188
    %v952 = vpop.f32.mrf.mxu0
    %v953 = vadd.f32 %v137, %v952
    %954 = vdwg.mxu0
    %v955 = vmul.f32 %v908, 0.5
    %v956 = vmul.f32 %v911, 0.5
    %v957 = vmul.f32 %v914, 0.5
    %v958 = vmul.f32 %v917, 0.5
    %v959 = vtanh.pop %v955
    %v960 = vtanh.pop %v956
    %v961 = vtanh.pop %v957
    %v962 = vtanh.pop %v958
    %v963 = vadd.f32 %v959, 1.0
    %v964 = vadd.f32 %v960, 1.0
    %v965 = vadd.f32 %v961, 1.0
    %v966 = vadd.f32 %v962, 1.0
    %v967 = vmul.f32 %v963, 0.5
    %v968 = vmul.f32 %v964, 0.5
    %v969 = vmul.f32 %v965, 0.5
    %v970 = vmul.f32 %v966, 0.5
    %v971 = vmul.f32 %v920, 0.5
    %v972 = vmul.f32 %v923, 0.5
    %v973 = vmul.f32 %v926, 0.5
    %v974 = vmul.f32 %v929, 0.5
    %v975 = vtanh.pop %v971
    %v976 = vtanh.pop %v972
    %v977 = vtanh.pop %v973
    %v978 = vtanh.pop %v974
    %v979 = vadd.f32 %v975, 1.0
    %v980 = vadd.f32 %v976, 1.0
    %v981 = vadd.f32 %v977, 1.0
    %v982 = vadd.f32 %v978, 1.0
    %v983 = vmul.f32 %v979, 0.5
    %v984 = vmul.f32 %v980, 0.5
    %v985 = vmul.f32 %v981, 0.5
    %v986 = vmul.f32 %v982, 0.5
    %v987 = vtanh.pop %v932
    %v988 = vtanh.pop %v935
    %v989 = vtanh.pop %v938
    %v990 = vtanh.pop %v941
    %v991 = vmul.f32 %v944, 0.5
    %v992 = vmul.f32 %v947, 0.5
    %v993 = vmul.f32 %v950, 0.5
    %v994 = vmul.f32 %v953, 0.5
    %v995 = vtanh.pop %v991
    %v996 = vtanh.pop %v992
    %v997 = vtanh.pop %v993
    %v998 = vtanh.pop %v994
    %v999 = vadd.f32 %v995, 1.0
    %v1000 = vadd.f32 %v996, 1.0
    %v1001 = vadd.f32 %v997, 1.0
    %v1002 = vadd.f32 %v998, 1.0
    %v1003 = vmul.f32 %v999, 0.5
    %v1004 = vmul.f32 %v1000, 0.5
    %v1005 = vmul.f32 %v1001, 0.5
    %v1006 = vmul.f32 %v1002, 0.5
    %v1007 = vmul.f32 %v983, %v875
    %v1008 = vmul.f32 %v984, %v876
    %v1009 = vmul.f32 %v985, %v877
    %v1010 = vmul.f32 %v986, %v878
    %v1011 = vmul.f32 %v967, %v987
    %v1012 = vmul.f32 %v968, %v988
    %v1013 = vmul.f32 %v969, %v989
    %v1014 = vmul.f32 %v970, %v990
    %v1015 = vadd.f32 %v1007, %v1011
    %v1016 = vadd.f32 %v1008, %v1012
    %v1017 = vadd.f32 %v1009, %v1013
    %v1018 = vadd.f32 %v1010, %v1014
    %v1019 = vtanh.pop %v1015
    %v1020 = vtanh.pop %v1016
    %v1021 = vtanh.pop %v1017
    %v1022 = vtanh.pop %v1018
    %v1023 = vmul.f32 %v1003, %v1019
    %v1024 = vmul.f32 %v1004, %v1020
    %v1025 = vmul.f32 %v1005, %v1021
    %v1026 = vmul.f32 %v1006, %v1022
    %s1027 = scalar_lea.vmem %s0, 96
    %v1028 = vld [vmem:[%s1027] sm:$0xff]
    %v1029 = vld [vmem:[%s1027 + $0x8] sm:$0xff]
    %1030 = vmatpush.msra.mxu0 0.0
    %1031 = vmatpush.msra.mxu0 0.0
    %1032 = vmatpush.msra.mxu0 0.0
    %1033 = vmatpush.msra.mxu0 0.0
    %1034 = vmatpush.msra.mxu0 0.0
    %1035 = vmatpush.msra.mxu0 0.0
    %1036 = vmatpush.msra.mxu0 0.0
    %1037 = vmatpush.msra.mxu0 0.0
    %1038 = vmatpush.msra.mxu0 0.0
    %1039 = vmatpush.msra.mxu0 0.0
    %1040 = vmatpush.msra.mxu0 %v1026
    %1041 = vmatpush.msra.mxu0 %v1025
    %1042 = vmatpush.msra.mxu0 %v1024
    %1043 = vmatpush.msra.mxu0 %v1023
    %1044 = vmatpush.msra.mxu0 %v1029
    %1045 = vmatpush.msra.mxu0 %v1028
    %1046 = vmatmul.f32.gmra.mxu0 %v143
    %v1047 = vpop.f32.mrf.mxu0
    %v1048 = vadd.f32 %v62, %v1047
    %1049 = vmatmul.f32.gmra.mxu0 %v146
    %v1050 = vpop.f32.mrf.mxu0
    %v1051 = vadd.f32 %v67, %v1050
    %1052 = vmatmul.f32.gmra.mxu0 %v149
    %v1053 = vpop.f32.mrf.mxu0
    %v1054 = vadd.f32 %v72, %v1053
    %1055 = vmatmul.f32.gmra.mxu0 %v152
    %v1056 = vpop.f32.mrf.mxu0
    %v1057 = vadd.f32 %v77, %v1056
    %1058 = vmatmul.f32.gmra.mxu0 %v155
    %v1059 = vpop.f32.mrf.mxu0
    %v1060 = vadd.f32 %v82, %v1059
    %1061 = vmatmul.f32.gmra.mxu0 %v158
    %v1062 = vpop.f32.mrf.mxu0
    %v1063 = vadd.f32 %v87, %v1062
    %1064 = vmatmul.f32.gmra.mxu0 %v161
    %v1065 = vpop.f32.mrf.mxu0
    %v1066 = vadd.f32 %v92, %v1065
    %1067 = vmatmul.f32.gmra.mxu0 %v164
    %v1068 = vpop.f32.mrf.mxu0
    %v1069 = vadd.f32 %v97, %v1068
    %1070 = vmatmul.f32.gmra.mxu0 %v167
    %v1071 = vpop.f32.mrf.mxu0
    %v1072 = vadd.f32 %v102, %v1071
    %1073 = vmatmul.f32.gmra.mxu0 %v170
    %v1074 = vpop.f32.mrf.mxu0
    %v1075 = vadd.f32 %v107, %v1074
    %1076 = vmatmul.f32.gmra.mxu0 %v173
    %v1077 = vpop.f32.mrf.mxu0
    %v1078 = vadd.f32 %v112, %v1077
    %1079 = vmatmul.f32.gmra.mxu0 %v176
    %v1080 = vpop.f32.mrf.mxu0
    %v1081 = vadd.f32 %v117, %v1080
    %1082 = vmatmul.f32.gmra.mxu0 %v179
    %v1083 = vpop.f32.mrf.mxu0
    %v1084 = vadd.f32 %v122, %v1083
    %1085 = vmatmul.f32.gmra.mxu0 %v182
    %v1086 = vpop.f32.mrf.mxu0
    %v1087 = vadd.f32 %v127, %v1086
    %1088 = vmatmul.f32.gmra.mxu0 %v185
    %v1089 = vpop.f32.mrf.mxu0
    %v1090 = vadd.f32 %v132, %v1089
    %1091 = vmatmul.f32.gmra.mxu0 %v188
    %v1092 = vpop.f32.mrf.mxu0
    %v1093 = vadd.f32 %v137, %v1092
    %1094 = vdwg.mxu0
    %v1095 = vmul.f32 %v1048, 0.5
    %v1096 = vmul.f32 %v1051, 0.5
    %v1097 = vmul.f32 %v1054, 0.5
    %v1098 = vmul.f32 %v1057, 0.5
    %v1099 = vtanh.pop %v1095
    %v1100 = vtanh.pop %v1096
    %v1101 = vtanh.pop %v1097
    %v1102 = vtanh.pop %v1098
    %v1103 = vadd.f32 %v1099, 1.0
    %v1104 = vadd.f32 %v1100, 1.0
    %v1105 = vadd.f32 %v1101, 1.0
    %v1106 = vadd.f32 %v1102, 1.0
    %v1107 = vmul.f32 %v1103, 0.5
    %v1108 = vmul.f32 %v1104, 0.5
    %v1109 = vmul.f32 %v1105, 0.5
    %v1110 = vmul.f32 %v1106, 0.5
    %v1111 = vmul.f32 %v1060, 0.5
    %v1112 = vmul.f32 %v1063, 0.5
    %v1113 = vmul.f32 %v1066, 0.5
    %v1114 = vmul.f32 %v1069, 0.5
    %v1115 = vtanh.pop %v1111
    %v1116 = vtanh.pop %v1112
    %v1117 = vtanh.pop %v1113
    %v1118 = vtanh.pop %v1114
    %v1119 = vadd.f32 %v1115, 1.0
    %v1120 = vadd.f32 %v1116, 1.0
    %v1121 = vadd.f32 %v1117, 1.0
    %v1122 = vadd.f32 %v1118, 1.0
    %v1123 = vmul.f32 %v1119, 0.5
    %v1124 = vmul.f32 %v1120, 0.5
    %v1125 = vmul.f32 %v1121, 0.5
    %v1126 = vmul.f32 %v1122, 0.5
    %v1127 = vtanh.pop %v1072
    %v1128 = vtanh.pop %v1075
    %v1129 = vtanh.pop %v1078
    %v1130 = vtanh.pop %v1081
    %v1131 = vmul.f32 %v1084, 0.5
    %v1132 = vmul.f32 %v1087, 0.5
    %v1133 = vmul.f32 %v1090, 0.5
    %v1134 = vmul.f32 %v1093, 0.5
    %v1135 = vtanh.pop %v1131
    %v1136 = vtanh.pop %v1132
    %v1137 = vtanh.pop %v1133
    %v1138 = vtanh.pop %v1134
    %v1139 = vadd.f32 %v1135, 1.0
    %v1140 = vadd.f32 %v1136, 1.0
    %v1141 = vadd.f32 %v1137, 1.0
    %v1142 = vadd.f32 %v1138, 1.0
    %v1143 = vmul.f32 %v1139, 0.5
    %v1144 = vmul.f32 %v1140, 0.5
    %v1145 = vmul.f32 %v1141, 0.5
    %v1146 = vmul.f32 %v1142, 0.5
    %v1147 = vmul.f32 %v1123, %v1015
    %v1148 = vmul.f32 %v1124, %v1016
    %v1149 = vmul.f32 %v1125, %v1017
    %v1150 = vmul.f32 %v1126, %v1018
    %v1151 = vmul.f32 %v1107, %v1127
    %v1152 = vmul.f32 %v1108, %v1128
    %v1153 = vmul.f32 %v1109, %v1129
    %v1154 = vmul.f32 %v1110, %v1130
    %v1155 = vadd.f32 %v1147, %v1151
    %v1156 = vadd.f32 %v1148, %v1152
    %v1157 = vadd.f32 %v1149, %v1153
    %v1158 = vadd.f32 %v1150, %v1154
    %v1159 = vtanh.pop %v1155
    %v1160 = vtanh.pop %v1156
    %v1161 = vtanh.pop %v1157
    %v1162 = vtanh.pop %v1158
    %v1163 = vmul.f32 %v1143, %v1159
    %v1164 = vmul.f32 %v1144, %v1160
    %v1165 = vmul.f32 %v1145, %v1161
    %v1166 = vmul.f32 %v1146, %v1162
    %s1167 = scalar_lea.vmem %s0, 112
    %v1168 = vld [vmem:[%s1167] sm:$0xff]
    %v1169 = vld [vmem:[%s1167 + $0x8] sm:$0xff]
    %1170 = vmatpush.msra.mxu0 0.0
    %1171 = vmatpush.msra.mxu0 0.0
    %1172 = vmatpush.msra.mxu0 0.0
    %1173 = vmatpush.msra.mxu0 0.0
    %1174 = vmatpush.msra.mxu0 0.0
    %1175 = vmatpush.msra.mxu0 0.0
    %1176 = vmatpush.msra.mxu0 0.0
    %1177 = vmatpush.msra.mxu0 0.0
    %1178 = vmatpush.msra.mxu0 0.0
    %1179 = vmatpush.msra.mxu0 0.0
    %1180 = vmatpush.msra.mxu0 %v1166
    %1181 = vmatpush.msra.mxu0 %v1165
    %1182 = vmatpush.msra.mxu0 %v1164
    %1183 = vmatpush.msra.mxu0 %v1163
    %1184 = vmatpush.msra.mxu0 %v1169
    %1185 = vmatpush.msra.mxu0 %v1168
    %1186 = vmatmul.f32.gmra.mxu0 %v143
    %v1187 = vpop.f32.mrf.mxu0
    %v1188 = vadd.f32 %v62, %v1187
    %1189 = vmatmul.f32.gmra.mxu0 %v146
    %v1190 = vpop.f32.mrf.mxu0
    %v1191 = vadd.f32 %v67, %v1190
    %1192 = vmatmul.f32.gmra.mxu0 %v149
    %v1193 = vpop.f32.mrf.mxu0
    %v1194 = vadd.f32 %v72, %v1193
    %1195 = vmatmul.f32.gmra.mxu0 %v152
    %v1196 = vpop.f32.mrf.mxu0
    %v1197 = vadd.f32 %v77, %v1196
    %1198 = vmatmul.f32.gmra.mxu0 %v155
    %v1199 = vpop.f32.mrf.mxu0
    %v1200 = vadd.f32 %v82, %v1199
    %1201 = vmatmul.f32.gmra.mxu0 %v158
    %v1202 = vpop.f32.mrf.mxu0
    %v1203 = vadd.f32 %v87, %v1202
    %1204 = vmatmul.f32.gmra.mxu0 %v161
    %v1205 = vpop.f32.mrf.mxu0
    %v1206 = vadd.f32 %v92, %v1205
    %1207 = vmatmul.f32.gmra.mxu0 %v164
    %v1208 = vpop.f32.mrf.mxu0
    %v1209 = vadd.f32 %v97, %v1208
    %1210 = vmatmul.f32.gmra.mxu0 %v167
    %v1211 = vpop.f32.mrf.mxu0
    %v1212 = vadd.f32 %v102, %v1211
    %1213 = vmatmul.f32.gmra.mxu0 %v170
    %v1214 = vpop.f32.mrf.mxu0
    %v1215 = vadd.f32 %v107, %v1214
    %1216 = vmatmul.f32.gmra.mxu0 %v173
    %v1217 = vpop.f32.mrf.mxu0
    %v1218 = vadd.f32 %v112, %v1217
    %1219 = vmatmul.f32.gmra.mxu0 %v176
    %v1220 = vpop.f32.mrf.mxu0
    %v1221 = vadd.f32 %v117, %v1220
    %1222 = vmatmul.f32.gmra.mxu0 %v179
    %v1223 = vpop.f32.mrf.mxu0
    %v1224 = vadd.f32 %v122, %v1223
    %1225 = vmatmul.f32.gmra.mxu0 %v182
    %v1226 = vpop.f32.mrf.mxu0
    %v1227 = vadd.f32 %v127, %v1226
    %1228 = vmatmul.f32.gmra.mxu0 %v185
    %v1229 = vpop.f32.mrf.mxu0
    %v1230 = vadd.f32 %v132, %v1229
    %1231 = vmatmul.f32.gmra.mxu0 %v188
    %v1232 = vpop.f32.mrf.mxu0
    %v1233 = vadd.f32 %v137, %v1232
    %1234 = vdwg.mxu0
    %v1235 = vmul.f32 %v1188, 0.5
    %v1236 = vmul.f32 %v1191, 0.5
    %v1237 = vmul.f32 %v1194, 0.5
    %v1238 = vmul.f32 %v1197, 0.5
    %v1239 = vtanh.pop %v1235
    %v1240 = vtanh.pop %v1236
    %v1241 = vtanh.pop %v1237
    %v1242 = vtanh.pop %v1238
    %v1243 = vadd.f32 %v1239, 1.0
    %v1244 = vadd.f32 %v1240, 1.0
    %v1245 = vadd.f32 %v1241, 1.0
    %v1246 = vadd.f32 %v1242, 1.0
    %v1247 = vmul.f32 %v1243, 0.5
    %v1248 = vmul.f32 %v1244, 0.5
    %v1249 = vmul.f32 %v1245, 0.5
    %v1250 = vmul.f32 %v1246, 0.5
    %v1251 = vmul.f32 %v1200, 0.5
    %v1252 = vmul.f32 %v1203, 0.5
    %v1253 = vmul.f32 %v1206, 0.5
    %v1254 = vmul.f32 %v1209, 0.5
    %v1255 = vtanh.pop %v1251
    %v1256 = vtanh.pop %v1252
    %v1257 = vtanh.pop %v1253
    %v1258 = vtanh.pop %v1254
    %v1259 = vadd.f32 %v1255, 1.0
    %v1260 = vadd.f32 %v1256, 1.0
    %v1261 = vadd.f32 %v1257, 1.0
    %v1262 = vadd.f32 %v1258, 1.0
    %v1263 = vmul.f32 %v1259, 0.5
    %v1264 = vmul.f32 %v1260, 0.5
    %v1265 = vmul.f32 %v1261, 0.5
    %v1266 = vmul.f32 %v1262, 0.5
    %v1267 = vtanh.pop %v1212
    %v1268 = vtanh.pop %v1215
    %v1269 = vtanh.pop %v1218
    %v1270 = vtanh.pop %v1221
    %v1271 = vmul.f32 %v1224, 0.5
    %v1272 = vmul.f32 %v1227, 0.5
    %v1273 = vmul.f32 %v1230, 0.5
    %v1274 = vmul.f32 %v1233, 0.5
    %v1275 = vtanh.pop %v1271
    %v1276 = vtanh.pop %v1272
    %v1277 = vtanh.pop %v1273
    %v1278 = vtanh.pop %v1274
    %v1279 = vadd.f32 %v1275, 1.0
    %v1280 = vadd.f32 %v1276, 1.0
    %v1281 = vadd.f32 %v1277, 1.0
    %v1282 = vadd.f32 %v1278, 1.0
    %v1283 = vmul.f32 %v1279, 0.5
    %v1284 = vmul.f32 %v1280, 0.5
    %v1285 = vmul.f32 %v1281, 0.5
    %v1286 = vmul.f32 %v1282, 0.5
    %v1287 = vmul.f32 %v1263, %v1155
    %v1288 = vmul.f32 %v1264, %v1156
    %v1289 = vmul.f32 %v1265, %v1157
    %v1290 = vmul.f32 %v1266, %v1158
    %v1291 = vmul.f32 %v1247, %v1267
    %v1292 = vmul.f32 %v1248, %v1268
    %v1293 = vmul.f32 %v1249, %v1269
    %v1294 = vmul.f32 %v1250, %v1270
    %v1295 = vadd.f32 %v1287, %v1291
    %v1296 = vadd.f32 %v1288, %v1292
    %v1297 = vadd.f32 %v1289, %v1293
    %v1298 = vadd.f32 %v1290, %v1294
    %v1299 = vtanh.pop %v1295
    %v1300 = vtanh.pop %v1296
    %v1301 = vtanh.pop %v1297
    %v1302 = vtanh.pop %v1298
    %v1303 = vmul.f32 %v1283, %v1299
    %v1304 = vmul.f32 %v1284, %v1300
    %v1305 = vmul.f32 %v1285, %v1301
    %v1306 = vmul.f32 %v1286, %v1302
    %v1307 = vld [vmem:[%s3] sm:$0xff]
    %v1308 = vld [vmem:[%s3 + $0x8] sm:$0xff]
    %v1309 = vld [vmem:[%s3 + $0x10] sm:$0xff]
    %v1310 = vld [vmem:[%s3 + $0x18] sm:$0xff]
    %v1311 = vld [vmem:[%s4] sm:$0xff]
    %v1312 = vld [vmem:[%s4 + $0x8] sm:$0xff]
    %v1313 = vld [vmem:[%s4 + $0x10] sm:$0xff]
    %v1314 = vld [vmem:[%s4 + $0x18] sm:$0xff]
    %1316 = vset.pattern.permute.xlu0 0
    %1317 = vperm.xlu0 %1316, %v1311
    %v1318 = vpop.permute.xlu0 %1317
    %1321 = vset.pattern.permute.xlu0 0
    %1322 = vperm.xlu0 %1321, %v1312
    %v1323 = vpop.permute.xlu0 %1322
    %1326 = vset.pattern.permute.xlu0 0
    %1327 = vperm.xlu0 %1326, %v1313
    %v1328 = vpop.permute.xlu0 %1327
    %1331 = vset.pattern.permute.xlu0 0
    %1332 = vperm.xlu0 %1331, %v1314
    %v1333 = vpop.permute.xlu0 %1332
    %vm1335 = vcmask 261120
    %v1337 = vsel %vm1335, %v1307, 0
    %v1340 = vsel %vm1335, %v1308, 0
    %v1343 = vsel %vm1335, %v1309, 0
    %v1346 = vsel %vm1335, %v1310, 0
    %1348 = vmatpush.msra.mxu0 0.0
    %1349 = vmatpush.msra.mxu0 0.0
    %1350 = vmatpush.msra.mxu0 0.0
    %1351 = vmatpush.msra.mxu0 0.0
    %1352 = vmatpush.msra.mxu0 0.0
    %1353 = vmatpush.msra.mxu0 0.0
    %1354 = vmatpush.msra.mxu0 0.0
    %1355 = vmatpush.msra.mxu0 0.0
    %1356 = vmatpush.msra.mxu0 0.0
    %1357 = vmatpush.msra.mxu0 0.0
    %1358 = vmatpush.msra.mxu0 0.0
    %1359 = vmatpush.msra.mxu0 0.0
    %1360 = vmatpush.msra.mxu0 %v1306
    %1361 = vmatpush.msra.mxu0 %v1305
    %1362 = vmatpush.msra.mxu0 %v1304
    %1363 = vmatpush.msra.mxu0 %v1303
    %1364 = vmatmul.f32.gmra.mxu0 %v1337
    %v1365 = vpop.f32.mrf.mxu0
    %v1366 = vadd.f32 %v1318, %v1365
    %1367 = vmatmul.f32.gmra.mxu0 %v1340
    %v1368 = vpop.f32.mrf.mxu0
    %v1369 = vadd.f32 %v1323, %v1368
    %1370 = vmatmul.f32.gmra.mxu0 %v1343
    %v1371 = vpop.f32.mrf.mxu0
    %v1372 = vadd.f32 %v1328, %v1371
    %1373 = vmatmul.f32.gmra.mxu0 %v1346
    %v1374 = vpop.f32.mrf.mxu0
    %v1375 = vadd.f32 %v1333, %v1374
    %1376 = vdwg.mxu0
    %v1377 = vmax.f32 %v1366, 0.0
    %v1378 = vmax.f32 %v1369, 0.0
    %v1379 = vmax.f32 %v1372, 0.0
    %v1380 = vmax.f32 %v1375, 0.0
    %v1381 = vld [vmem:[%s5] sm:$0xff]
    %v1382 = vld [vmem:[%s6] sm:$0xff]
    %1384 = vset.pattern.permute.xlu0 0
    %1385 = vperm.xlu0 %1384, %v1382
    %v1386 = vpop.permute.xlu0 %1385
    %v1389 = vsel %vm1335, %v1381, 0
    %1391 = vmatpush.msra.mxu0 0.0
    %1392 = vmatpush.msra.mxu0 0.0
    %1393 = vmatpush.msra.mxu0 0.0
    %1394 = vmatpush.msra.mxu0 0.0
    %1395 = vmatpush.msra.mxu0 0.0
    %1396 = vmatpush.msra.mxu0 0.0
    %1397 = vmatpush.msra.mxu0 0.0
    %1398 = vmatpush.msra.mxu0 0.0
    %1399 = vmatpush.msra.mxu0 0.0
    %1400 = vmatpush.msra.mxu0 0.0
    %1401 = vmatpush.msra.mxu0 0.0
    %1402 = vmatpush.msra.mxu0 0.0
    %1403 = vmatpush.msra.mxu0 %v1380
    %1404 = vmatpush.msra.mxu0 %v1379
    %1405 = vmatpush.msra.mxu0 %v1378
    %1406 = vmatpush.msra.mxu0 %v1377
    %1407 = vmatmul.f32.gmra.mxu0 %v1389
    %v1408 = vpop.f32.mrf.mxu0
    %v1409 = vadd.f32 %v1386, %v1408
    %1410 = vdwg.mxu0
    %v1411 = vrot.slane %v1409, 4
    %v1412 = vmax.f32 %v1409, %v1411
    %v1413 = vrot.slane %v1412, 2
    %v1414 = vmax.f32 %v1412, %v1413
    %v1415 = vrot.slane %v1414, 1
    %v1416 = vmax.f32 %v1414, %v1415
    %v1417 = vsub.f32 %v1409, %v1416
    %v1418 = vmul.f32 %v1417, 1.442695
    %v1419 = vpow.pop %v1418
    %v1420 = vrot.slane %v1419, 4
    %v1421 = vadd.f32 %v1419, %v1420
    %v1422 = vrot.slane %v1421, 2
    %v1423 = vadd.f32 %v1421, %v1422
    %v1424 = vrot.slane %v1423, 1
    %v1425 = vadd.f32 %v1423, %v1424
    %v1426 = vlog2.pop %v1425
    %v1427 = vmul.f32 %v1426, 0.6931472
    %v1428 = vadd.f32 %v1416, %v1427
    %v1429 = vsub.f32 %v1409, %v1428
    %1430 = vst [vmem:[#allocation2] sm:$0xff] %v1429
    // Predicated region
    $region30: #{tpu_custom_call.1} parent=1 // pred_check
      _
    $region31: #{tpu_custom_call.1} parent=1 // pred_check_branch
      %1432 = sbr.rel (0) target = $region33
    $region32: #{tpu_custom_call.1} parent=1 // pred_region
      %1434 = vsyncadd [#allocation3], 0
      %s1436 = sshll.u32 [#allocation2], 4
      %s1437 = int_to_ptr.vmem [resolvable:$true] %s1436
      %s1438 = sshll.u32 %s7, 4
      %s1439 = int_to_ptr.hbm [resolvable:$true] %s1438
      %1441 = dma.vmem_to_hbm [thread:$0]  %s1437, 128, %s1439, [#allocation3]
    $region33: #{tpu_custom_call.1} parent=1 // pred_fallthru
      _
    // Predicated region
    $region34: #{tpu_custom_call.1} parent=1 // pred_check
      _
    $region35: #{tpu_custom_call.1} parent=1 // pred_check_branch
      %1443 = sbr.rel (0) target = $region37
    $region36: #{tpu_custom_call.1} parent=1 // pred_region
      %1445 = dma.done [#allocation3], 128
    $region37: #{tpu_custom_call.1} parent=1 // pred_fallthru
      _
    %1446 = vsyncpa [#allocation3], 1

</llo_original>
